<compile_context>
chip_gen: v5e
topology: v5e:2x2
jax: 0.10.0
libtpu: 0.0.40
codegen_flags: <defaults>
</compile_context>

<pallas_src>
import functools

import jax
import jax.numpy as jnp
from jax.experimental import pallas as pl
from jax.experimental.pallas import tpu as pltpu


def _detection_kernel(heat_ref, x_ref, grid_ref, feat_ref, loc_ref, *, k, kp):
    # heat_ref: (Bt, HW)      heatmap channel, sublane-dense
    # x_ref:    (Bt, C, HW)   full feature slab
    # grid_ref: (2, HW)       flattened (x, y) coordinate grids (resident)
    # feat_ref: (Bt, C, Kp)   gathered features, lane-dense (Kp = k padded to 128)
    # loc_ref:  (Bt, 2, Kp)   gathered (x, y) locations, lane-dense
    heat = heat_ref[...].astype(jnp.float32)                  # (Bt, HW)
    bt, hw = heat.shape
    lane = jax.lax.broadcasted_iota(jnp.int32, (bt, hw), 1)   # (Bt, HW)

    # Iterative per-row top-k over the heatmap only (k is small & static ->
    # unrolled).  Values come out sorted descending; ties resolve to the lowest
    # index, matching jax.lax.top_k / torch.topk ordering.
    # TODO(synk): switch to jnp.argmax (one cross-lane reduce per step instead
    # of two) once argmax lowering in Mosaic is confirmed on all targets.
    # TODO(synk): NaNs are not propagated the way torch.topk would, and rows
    # with fewer than k finite values repeat index 0 for the tail picks.
    work = heat
    idx_cols = []
    for _ in range(k):
        mval = jnp.max(work, axis=-1, keepdims=True)                     # (Bt, 1)
        hit = work == mval                                               # (Bt, HW)
        idx = jnp.min(jnp.where(hit, lane, hw), axis=-1, keepdims=True)  # (Bt, 1)
        idx_cols.append(idx)
        work = jnp.where(lane == idx, -jnp.inf, work)                    # knock out

    # Pad the index row out to Kp lanes with a sentinel (-1 never matches a
    # lane id) so the padded one-hot rows are all-zero and the output block
    # stays lane-dense (unmasked vst instead of masked partial stores).
    if kp > k:
        idx_cols.append(jnp.full((bt, kp - k), -1, jnp.int32))
    idx_bk = jnp.concatenate(idx_cols, axis=-1)                          # (Bt, Kp)

    # Exact 0/1 one-hot gather via the MXU; precision=HIGHEST keeps the f32
    # features/locations bit-accurate through the matmul (cost is negligible
    # at these matmul sizes).
    lane3 = jax.lax.broadcasted_iota(jnp.int32, (bt, kp, hw), 2)
    onehot = (idx_bk[:, :, None] == lane3).astype(jnp.float32)           # (Bt, Kp, HW)
    # TODO(synk): for very large k*HW slabs, build/contract the one-hot in
    # HW-chunks accumulating into a VMEM scratch instead of holding all of it.

    xf = x_ref[...].astype(jnp.float32)                                  # (Bt, C, HW)
    feat = jnp.einsum("bch,bkh->bck", xf, onehot,
                      preferred_element_type=jnp.float32,
                      precision=jax.lax.Precision.HIGHEST)               # (Bt, C, Kp)
    feat_ref[...] = feat.astype(feat_ref.dtype)

    gb = jnp.broadcast_to(grid_ref[...].astype(jnp.float32)[None], (bt, 2, hw))
    loc = jnp.einsum("bch,bkh->bck", gb, onehot,
                     preferred_element_type=jnp.float32,
                     precision=jax.lax.Precision.HIGHEST)                # (Bt, 2, Kp)
    loc_ref[...] = loc.astype(loc_ref.dtype)


def _choose_batch_tile(B, batch_tile, per_image_bytes, budget_bytes=40 * 1024 * 1024):
    # Divisors of B only -> no jnp.pad copy of the slab in HBM.
    divisors = [d for d in range(1, B + 1) if B % d == 0 and d <= batch_tile]
    # Prefer >= 2 grid steps so the "parallel" batch axis can split across
    # v7x's two TensorCores and the DMA pipeline has something to overlap.
    multi = [d for d in divisors if B // d >= 2]
    cands = multi if multi else divisors
    fitting = [d for d in cands if d * per_image_bytes <= budget_bytes]
    if not fitting:
        fitting = [min(cands)]
    return max(fitting)


def detection(x, k, *, batch_tile=None):
    """x: (B, C, H, W) float array. Returns (features (B, C, k), location (B, 2, k))."""
    B, C, H, W = x.shape
    HW = H * W
    assert k <= HW, "k must not exceed the number of spatial positions"
    Kp = max(128, ((k + 127) // 128) * 128)      # lane-dense output width

    itemsize = jnp.dtype(x.dtype).itemsize
    if batch_tile is None:
        # bf16 packs 16 sublanes per vreg -> bigger tile fills packed vregs.
        batch_tile = 16 if itemsize == 2 else 8

    # Rough per-image VMEM footprint (double-buffered blocks + f32 temporaries
    # + the one-hot, the largest intermediate) used to bound the batch tile.
    per_image = (2 * C * HW * itemsize + 2 * HW * itemsize
                 + 4 * HW * 4 + Kp * HW * 4 + (C + 2) * Kp * (2 * itemsize + 4))
    Bt = _choose_batch_tile(B, batch_tile, per_image)
    # TODO(synk): for B == 1 with very large C*HW, add a channel grid axis so
    # the slab DMA overlaps the top-k loop instead of being fully exposed.

    x_flat = x.reshape(B, C, HW)
    heat = x_flat[:, :1, :]                      # (B, 1, HW): tiny HBM slice; gives
                                                 # the kernel a sublane-dense heatmap

    # grid(): x = linspace(-1, 1, W) tiled over rows, y = linspace(1, -1, H)
    # repeated over cols (same as the torch module), flattened.  Stays as one
    # small un-broadcast (2, HW) resident block (no per-image HBM broadcast).
    xg = jnp.tile(jnp.linspace(-1.0, 1.0, W, dtype=x.dtype), H)          # (HW,)
    yg = jnp.repeat(jnp.linspace(1.0, -1.0, H, dtype=x.dtype), W)        # (HW,)
    grids = jnp.stack([xg, yg], axis=0)                                  # (2, HW)

    est = (2 * Bt * C * HW * itemsize            # double-buffered feature block
           + 2 * Bt * HW * itemsize              # double-buffered heatmap block
           + 2 * 2 * HW * itemsize               # resident grid block
           + 2 * Bt * (C + 2) * Kp * itemsize    # double-buffered output blocks
           + 4 * Bt * HW * 4                     # f32 heat/work/lane/hit temps
           + Bt * Kp * HW * 4                    # one-hot
           + Bt * (C + 2) * Kp * 4)              # f32 einsum results
    compiler_kwargs = dict(dimension_semantics=("parallel",))
    if est > 12 * 1024 * 1024:
        # Leave headroom under v7x's 64 MiB physical VMEM per TensorCore.
        compiler_kwargs["vmem_limit_bytes"] = min(
            max(int(est * 1.5), 32 * 1024 * 1024), 48 * 1024 * 1024)

    kernel = functools.partial(_detection_kernel, k=k, kp=Kp)
    feat_p, loc_p = pl.pallas_call(
        kernel,
        out_shape=(jax.ShapeDtypeStruct((B, C, Kp), x.dtype),
                   jax.ShapeDtypeStruct((B, 2, Kp), x.dtype)),
        grid_spec=pltpu.PrefetchScalarGridSpec(
            num_scalar_prefetch=0,
            grid=(B // Bt,),
            in_specs=[
                pl.BlockSpec((Bt, None, HW), lambda b: (b, 0, 0)),   # heatmap (squeezed)
                pl.BlockSpec((Bt, C, HW), lambda b: (b, 0, 0)),      # feature slab
                pl.BlockSpec((2, HW), lambda b: (0, 0)),             # coord grid (resident)
            ],
            out_specs=[
                pl.BlockSpec((Bt, C, Kp), lambda b: (b, 0, 0)),
                pl.BlockSpec((Bt, 2, Kp), lambda b: (b, 0, 0)),
            ],
        ),
        compiler_params=pltpu.CompilerParams(**compiler_kwargs),
    )(heat, x_flat, grids)

    return feat_p[:, :, :k], loc_p[:, :, :k]


def _reference(x, k):
    """Pure-JAX reference mirroring the torch forward, for a sanity check."""
    B, C, H, W = x.shape
    x_flat = x.reshape(B, C, H * W)
    heat = x_flat[:, 0]                                            # (B, HW)
    _, idx = jax.lax.top_k(heat, k)                                # (B, k), sorted desc
    feat = jnp.take_along_axis(x_flat, idx[:, None, :], axis=2)    # (B, C, k)
    xg = jnp.tile(jnp.linspace(-1.0, 1.0, W, dtype=x.dtype), H)    # (HW,)
    yg = jnp.repeat(jnp.linspace(1.0, -1.0, H, dtype=x.dtype), W)
    xl = jnp.take_along_axis(jnp.broadcast_to(xg, (B, H * W)), idx, axis=1)
    yl = jnp.take_along_axis(jnp.broadcast_to(yg, (B, H * W)), idx, axis=1)
    loc = jnp.stack([xl, yl], axis=1)                              # (B, 2, k)
    return feat, loc


if __name__ == "__main__":
    B, C, H, W, K = 2, 4, 16, 16, 4
    key = jax.random.PRNGKey(0)
    x = jax.random.normal(key, (B, C, H, W), dtype=jnp.float32)

    feat, loc = detection(x, K)
    jax.block_until_ready((feat, loc))

    feat_ref, loc_ref = _reference(x, K)
    assert feat.shape == (B, C, K) and loc.shape == (B, 2, K)
    assert jnp.allclose(feat, feat_ref, atol=1e-5), "feature mismatch"
    assert jnp.allclose(loc, loc_ref, atol=1e-5), "location mismatch"

    print("KERNEL_OK")
</pallas_src>

<mosaic_0001>
module attributes {stable_mosaic.version = 11 : i64} {
  func.func @_detection_kernel(%arg0: i32, %arg1: memref<1x1x256xf32, #tpu.memory_space<vmem>>, %arg2: memref<1x4x256xf32, #tpu.memory_space<vmem>>, %arg3: memref<2x256xf32, #tpu.memory_space<vmem>>, %arg4: memref<1x4x128xf32, #tpu.memory_space<vmem>>, %arg5: memref<1x2x128xf32, #tpu.memory_space<vmem>>) attributes {dimension_semantics = [#tpu.dimension_semantics<parallel>], iteration_bounds = array<i64: 2>, scalar_prefetch = 0 : i64, scratch_operands = 0 : i64, tpu.core_type = #tpu.core_type<tc>, window_params = [{transform_indices = @transform_0, window_bounds = array<i64: 1, 1, 256>}, {transform_indices = @transform_1, window_bounds = array<i64: 1, 4, 256>}, {pipeline_mode = #tpu.pipeline_mode<synchronous>, transform_indices = @transform_2, window_bounds = array<i64: 2, 256>}, {transform_indices = @transform_3, window_bounds = array<i64: 1, 4, 128>}, {transform_indices = @transform_4, window_bounds = array<i64: 1, 2, 128>}]} {
    %c0 = arith.constant 0 : index
    %c0_0 = arith.constant 0 : index
    %c0_1 = arith.constant 0 : index
    %0 = vector.load %arg1[%c0, %c0_0, %c0_1] : memref<1x1x256xf32, #tpu.memory_space<vmem>>, vector<1x1x256xf32>
    %1 = vector.shape_cast %0 : vector<1x1x256xf32> to vector<1x256xf32>
    %2 = tpu.iota {dimensions = array<i32: 1>} : vector<1x256xi32>
    %cst = arith.constant dense<0xFF800000> : vector<1xf32>
    %3 = vector.multi_reduction <maximumf>, %1, %cst [1] : vector<1x256xf32> to vector<1xf32>
    %4 = vector.shape_cast %3 : vector<1xf32> to vector<1x1xf32>
    %5 = vector.broadcast %4 : vector<1x1xf32> to vector<1x256xf32>
    %6 = arith.cmpf oeq, %1, %5 : vector<1x256xf32>
    %c256_i32 = arith.constant 256 : i32
    %7 = vector.broadcast %c256_i32 : i32 to vector<1x256xi32>
    %8 = arith.select %6, %2, %7 : vector<1x256xi1>, vector<1x256xi32>
    %cst_2 = arith.constant dense<2147483647> : vector<1xi32>
    %9 = vector.multi_reduction <minsi>, %8, %cst_2 [1] : vector<1x256xi32> to vector<1xi32>
    %10 = vector.shape_cast %9 : vector<1xi32> to vector<1x1xi32>
    %11 = vector.broadcast %10 : vector<1x1xi32> to vector<1x256xi32>
    %12 = arith.cmpi eq, %2, %11 : vector<1x256xi32>
    %cst_3 = arith.constant 0xFF800000 : f32
    %13 = vector.broadcast %cst_3 : f32 to vector<1x256xf32>
    %14 = arith.select %12, %13, %1 : vector<1x256xi1>, vector<1x256xf32>
    %cst_4 = arith.constant dense<0xFF800000> : vector<1xf32>
    %15 = vector.multi_reduction <maximumf>, %14, %cst_4 [1] : vector<1x256xf32> to vector<1xf32>
    %16 = vector.shape_cast %15 : vector<1xf32> to vector<1x1xf32>
    %17 = vector.broadcast %16 : vector<1x1xf32> to vector<1x256xf32>
    %18 = arith.cmpf oeq, %14, %17 : vector<1x256xf32>
    %c256_i32_5 = arith.constant 256 : i32
    %19 = vector.broadcast %c256_i32_5 : i32 to vector<1x256xi32>
    %20 = arith.select %18, %2, %19 : vector<1x256xi1>, vector<1x256xi32>
    %cst_6 = arith.constant dense<2147483647> : vector<1xi32>
    %21 = vector.multi_reduction <minsi>, %20, %cst_6 [1] : vector<1x256xi32> to vector<1xi32>
    %22 = vector.shape_cast %21 : vector<1xi32> to vector<1x1xi32>
    %23 = vector.broadcast %22 : vector<1x1xi32> to vector<1x256xi32>
    %24 = arith.cmpi eq, %2, %23 : vector<1x256xi32>
    %cst_7 = arith.constant 0xFF800000 : f32
    %25 = vector.broadcast %cst_7 : f32 to vector<1x256xf32>
    %26 = arith.select %24, %25, %14 : vector<1x256xi1>, vector<1x256xf32>
    %cst_8 = arith.constant dense<0xFF800000> : vector<1xf32>
    %27 = vector.multi_reduction <maximumf>, %26, %cst_8 [1] : vector<1x256xf32> to vector<1xf32>
    %28 = vector.shape_cast %27 : vector<1xf32> to vector<1x1xf32>
    %29 = vector.broadcast %28 : vector<1x1xf32> to vector<1x256xf32>
    %30 = arith.cmpf oeq, %26, %29 : vector<1x256xf32>
    %c256_i32_9 = arith.constant 256 : i32
    %31 = vector.broadcast %c256_i32_9 : i32 to vector<1x256xi32>
    %32 = arith.select %30, %2, %31 : vector<1x256xi1>, vector<1x256xi32>
    %cst_10 = arith.constant dense<2147483647> : vector<1xi32>
    %33 = vector.multi_reduction <minsi>, %32, %cst_10 [1] : vector<1x256xi32> to vector<1xi32>
    %34 = vector.shape_cast %33 : vector<1xi32> to vector<1x1xi32>
    %35 = vector.broadcast %34 : vector<1x1xi32> to vector<1x256xi32>
    %36 = arith.cmpi eq, %2, %35 : vector<1x256xi32>
    %cst_11 = arith.constant 0xFF800000 : f32
    %37 = vector.broadcast %cst_11 : f32 to vector<1x256xf32>
    %38 = arith.select %36, %37, %26 : vector<1x256xi1>, vector<1x256xf32>
    %cst_12 = arith.constant dense<0xFF800000> : vector<1xf32>
    %39 = vector.multi_reduction <maximumf>, %38, %cst_12 [1] : vector<1x256xf32> to vector<1xf32>
    %40 = vector.shape_cast %39 : vector<1xf32> to vector<1x1xf32>
    %41 = vector.broadcast %40 : vector<1x1xf32> to vector<1x256xf32>
    %42 = arith.cmpf oeq, %38, %41 : vector<1x256xf32>
    %c256_i32_13 = arith.constant 256 : i32
    %43 = vector.broadcast %c256_i32_13 : i32 to vector<1x256xi32>
    %44 = arith.select %42, %2, %43 : vector<1x256xi1>, vector<1x256xi32>
    %cst_14 = arith.constant dense<2147483647> : vector<1xi32>
    %45 = vector.multi_reduction <minsi>, %44, %cst_14 [1] : vector<1x256xi32> to vector<1xi32>
    %46 = vector.shape_cast %45 : vector<1xi32> to vector<1x1xi32>
    %c-1_i32 = arith.constant -1 : i32
    %47 = vector.broadcast %c-1_i32 : i32 to vector<1x124xi32>
    %48 = tpu.concatenate %10, %22, %34, %46, %47 in 1 : vector<1x1xi32>, vector<1x1xi32>, vector<1x1xi32>, vector<1x1xi32>, vector<1x124xi32> -> vector<1x128xi32>
    %49 = tpu.iota {dimensions = array<i32: 2>} : vector<1x128x256xi32>
    %50 = vector.shape_cast %48 : vector<1x128xi32> to vector<1x128x1xi32>
    %51 = vector.broadcast %50 : vector<1x128x1xi32> to vector<1x128x256xi32>
    %52 = arith.cmpi eq, %51, %49 : vector<1x128x256xi32>
    %53 = arith.extui %52 : vector<1x128x256xi1> to vector<1x128x256xi32>
    %54 = arith.sitofp %53 : vector<1x128x256xi32> to vector<1x128x256xf32>
    %c0_15 = arith.constant 0 : index
    %c0_16 = arith.constant 0 : index
    %c0_17 = arith.constant 0 : index
    %55 = vector.load %arg2[%c0_15, %c0_16, %c0_17] : memref<1x4x256xf32, #tpu.memory_space<vmem>>, vector<1x4x256xf32>
    "tpu.trace_start"() <{level = 10 : i32, message = "bch,bkh->bck"}> : () -> ()
    %cst_18 = arith.constant dense<0.000000e+00> : vector<1x4x128xf32>
    %56 = tpu.matmul %55, %54, %cst_18 {dimension_numbers = #tpu.dot_dimension_numbers<[2], [2], [1], [1], [0, 0, 0, 1, 1, 1], [0], [0]>, precision = #tpu.contract_precision<fp32>} : vector<1x4x256xf32>, vector<1x128x256xf32>, vector<1x4x128xf32> -> vector<1x4x128xf32>
    "tpu.trace_stop"() : () -> ()
    %c0_19 = arith.constant 0 : index
    %c0_20 = arith.constant 0 : index
    %c0_21 = arith.constant 0 : index
    %57 = vector.load %arg4[%c0_19, %c0_20, %c0_21] : memref<1x4x128xf32, #tpu.memory_space<vmem>>, vector<1x4x128xf32>
    tpu.vector_store %arg4[%c0_19, %c0_20, %c0_21], %56 {strides = array<i32>} : memref<1x4x128xf32, #tpu.memory_space<vmem>>, vector<1x4x128xf32>,
    %c0_22 = arith.constant 0 : index
    %c0_23 = arith.constant 0 : index
    %58 = vector.load %arg3[%c0_22, %c0_23] : memref<2x256xf32, #tpu.memory_space<vmem>>, vector<2x256xf32>
    %59 = vector.shape_cast %58 : vector<2x256xf32> to vector<1x2x256xf32>
    "tpu.trace_start"() <{level = 10 : i32, message = "bch,bkh->bck"}> : () -> ()
    %cst_24 = arith.constant dense<0.000000e+00> : vector<1x2x128xf32>
    %60 = tpu.matmul %59, %54, %cst_24 {dimension_numbers = #tpu.dot_dimension_numbers<[2], [2], [1], [1], [0, 0, 0, 1, 1, 1], [0], [0]>, precision = #tpu.contract_precision<fp32>} : vector<1x2x256xf32>, vector<1x128x256xf32>, vector<1x2x128xf32> -> vector<1x2x128xf32>
    "tpu.trace_stop"() : () -> ()
    %c0_25 = arith.constant 0 : index
    %c0_26 = arith.constant 0 : index
    %c0_27 = arith.constant 0 : index
    %61 = vector.load %arg5[%c0_25, %c0_26, %c0_27] : memref<1x2x128xf32, #tpu.memory_space<vmem>>, vector<1x2x128xf32>
    tpu.vector_store %arg5[%c0_25, %c0_26, %c0_27], %60 {strides = array<i32>} : memref<1x2x128xf32, #tpu.memory_space<vmem>>, vector<1x2x128xf32>,
    return
  }
  func.func @transform_0(%arg0: i32) -> (i32, i32, i32) {
    %c0_i32 = arith.constant 0 : i32
    %c0_i32_0 = arith.constant 0 : i32
    %c0_i32_1 = arith.constant 0 : i32
    return %arg0, %c0_i32, %c0_i32_0 : i32, i32, i32
  }
  func.func @transform_1(%arg0: i32) -> (i32, i32, i32) {
    %c0_i32 = arith.constant 0 : i32
    %c0_i32_0 = arith.constant 0 : i32
    %c0_i32_1 = arith.constant 0 : i32
    return %arg0, %c0_i32, %c0_i32_0 : i32, i32, i32
  }
  func.func @transform_2(%arg0: i32) -> (i32, i32) {
    %c0_i32 = arith.constant 0 : i32
    %c0_i32_0 = arith.constant 0 : i32
    %c0_i32_1 = arith.constant 0 : i32
    return %c0_i32, %c0_i32_0 : i32, i32
  }
  func.func @transform_3(%arg0: i32) -> (i32, i32, i32) {
    %c0_i32 = arith.constant 0 : i32
    %c0_i32_0 = arith.constant 0 : i32
    %c0_i32_1 = arith.constant 0 : i32
    return %arg0, %c0_i32, %c0_i32_0 : i32, i32, i32
  }
  func.func @transform_4(%arg0: i32) -> (i32, i32, i32) {
    %c0_i32 = arith.constant 0 : i32
    %c0_i32_0 = arith.constant 0 : i32
    %c0_i32_1 = arith.constant 0 : i32
    return %arg0, %c0_i32, %c0_i32_0 : i32, i32, i32
  }
}

</mosaic_0001>

<llo_original>
// kernel: tpu_custom_call.1
$region0: #{tpu_custom_call.1}
  #allocation0 [shape = 'u32[]', space=smem, size = 0x4, offset = 0x4, fixed_abs, tag = 'smem constant byte address 0x4 - core index']
  #allocation1 [shape = 'u32[72,128]{1,0:T(1,128)}', space=vmem, size = 0x9000, scoped, tag = 'internal scratch']
  %s0 = inlined_call_operand.hbm [shape: f32[2,1,256], index: 0, kind: input, shape index: {}]
  %s1 = inlined_call_operand.hbm [shape: f32[2,4,256], index: 1, kind: input, shape index: {}]
  %s2 = inlined_call_operand.hbm [shape: f32[2,256], index: 2, kind: input, shape index: {}]
  %s3 = inlined_call_operand.hbm [shape: f32[2,4,128], index: 3, kind: output, shape index: {0}]
  %s4 = inlined_call_operand.hbm [shape: f32[2,2,128], index: 4, kind: output, shape index: {1}]
  %5 = xla_tuple %s3, %s4
  %s6 = sld [smem:[#allocation0]]
  $region65: #{tpu_custom_call.1} parent=0
    _
  %s8 = ssub.s32 1, %s6
  %s9 = scalar_select 0, %s8, %s6
  $region1: #{tpu_custom_call.1} parent=0
    #allocation2 [shape = 'u8[2048]{0}', space=vmem, size = 0x800, scoped, tag = 'input window, operand 0']
    #allocation3 [shape = 's32[2]{0}', space=sflag, size = 0x8, scoped, tag = 'scoped memory for tpu_custom_call.1']
    #allocation4 [shape = 's32[2]{0}', space=sflag, size = 0x8, scoped, tag = 'scoped memory for tpu_custom_call.1']
    #allocation5 [shape = 'u8[8192]{0}', space=vmem, size = 0x2000, scoped, tag = 'input window, operand 1']
    #allocation6 [shape = 's32[2]{0}', space=sflag, size = 0x8, scoped, tag = 'scoped memory for tpu_custom_call.1']
    #allocation7 [shape = 'u8[2048]{0}', space=vmem, size = 0x800, scoped, tag = 'input window, operand 2, single buffered']
    #allocation8 [shape = 'u8[4096]{0}', space=vmem, size = 0x1000, scoped, tag = 'output window, operand 0']
    #allocation9 [shape = 'u8[2048]{0}', space=vmem, size = 0x800, scoped, tag = 'output window, operand 1']
    #allocation10 [shape = 's32[2]{0}', space=sflag, size = 0x8, scoped, tag = 'scoped memory for tpu_custom_call.1']
    %10 = vsyncpa [#allocation3], 0
    %s11 = scalar_lea.sflag [#allocation3], 1
    %12 = vsyncpa %s11, 0
    %13 = vsyncpa [#allocation6], 0
    %s14 = scalar_lea.sflag [#allocation6], 1
    %15 = vsyncpa %s14, 0
    %16 = vsyncpa [#allocation4], 0
    %s17 = scalar_lea.sflag [#allocation4], 1
    %18 = vsyncpa %s17, 0
    %19 = vsyncpa [#allocation10], 0
    %s20 = scalar_lea.sflag [#allocation10], 1
    %21 = vsyncpa %s20, 0
    loop: start=0, step=1, limit=4
    $region2: #{tpu_custom_call.1} parent=1 // loop_pre_header
      _
    $region3: #{tpu_custom_call.1} parent=1 // loop_header
      %s23 = sphi 0, %s27
      %p24 = scmp.ge.s32.totalorder %s23, 4
      %s33 = sphi 0, %s35
      %s36 = sphi 0, %s33
      %s37 = sphi 0, %s36
      %s53 = sphi 0, %s37
      %s59 = sphi 0, %s61
      %s62 = sphi 0, %s59
      %s63 = sphi 0, %s62
      %s79 = sphi 0, %s63
      %s83 = sphi 0, %s83
      %s85 = sphi 0, %s83
      %s86 = sphi 0, %s85
      %s100 = sphi 0, %s86
      %s106 = sphi 0, %s108
      %s109 = sphi 0, %s106
      %s110 = sphi 0, %s109
      %s126 = sphi 0, %s110
      %s132 = sphi 0, %s134
      %s135 = sphi 0, %s132
      %s136 = sphi 0, %s135
      %s152 = sphi 0, %s136
    $region4: #{tpu_custom_call.1} parent=1 // loop_header_branch
      %26 = sbr.rel (%p24) target = $region8
    $region5: #{tpu_custom_call.1} parent=1 // loop_body
      %s28 = ssub.s32 %s23, 1
      %s29 = ssub.s32 %s23, 2
      %s30 = sadd.s32 %s23, 1
      %s31 = ssub.s32 %s23, %s30
      %p32 = scmp.eq.s32.totalorder %s31, 0
      %s34 = sadd.s32 %s33, 1
      %s35 = scalar_select %p32, %s33, %s34
      %p38 = pneg %p32
      %p39 = scmp.eq.s32.totalorder %s23, 1
      %p40 = por %p38, %p39
      %p41 = scmp.ne.s32.totalorder %s33, %s36
      %p42 = scmp.eq.s32.totalorder %s23, 0
      %p43 = por %p41, %p42
      %p44 = scmp.ne.s32.totalorder %s33, %s36
      %p45 = scmp.eq.s32.totalorder %s28, 1
      %p46 = por %p44, %p45
      %p47 = scmp.ne.s32.totalorder %s36, %s37
      %p48 = scmp.eq.s32.totalorder %s28, 0
      %p49 = por %p47, %p48
      %p50 = scmp.ne.s32.totalorder %s36, %s37
      %p51 = scmp.eq.s32.totalorder %s29, 1
      %p52 = por %p50, %p51
      %p54 = scmp.ne.s32.totalorder %s37, %s53
      %p55 = scmp.eq.s32.totalorder %s29, 0
      %p56 = por %p54, %p55
      %s57 = ssub.s32 %s23, %s30
      %p58 = scmp.eq.s32.totalorder %s57, 0
      %s60 = sadd.s32 %s59, 1
      %s61 = scalar_select %p58, %s59, %s60
      %p64 = pneg %p58
      %p65 = scmp.eq.s32.totalorder %s23, 1
      %p66 = por %p64, %p65
      %p67 = scmp.ne.s32.totalorder %s59, %s62
      %p68 = scmp.eq.s32.totalorder %s23, 0
      %p69 = por %p67, %p68
      %p70 = scmp.ne.s32.totalorder %s59, %s62
      %p71 = scmp.eq.s32.totalorder %s28, 1
      %p72 = por %p70, %p71
      %p73 = scmp.ne.s32.totalorder %s62, %s63
      %p74 = scmp.eq.s32.totalorder %s28, 0
      %p75 = por %p73, %p74
      %p76 = scmp.ne.s32.totalorder %s62, %s63
      %p77 = scmp.eq.s32.totalorder %s29, 1
      %p78 = por %p76, %p77
      %p80 = scmp.ne.s32.totalorder %s63, %s79
      %p81 = scmp.eq.s32.totalorder %s29, 0
      %p82 = por %p80, %p81
      %s84 = sadd.s32 %s83, 1
      %p87 = scmp.eq.s32.totalorder %s23, 1
      %p88 = scmp.ne.s32.totalorder %s83, %s85
      %p89 = scmp.eq.s32.totalorder %s23, 0
      %p90 = por %p88, %p89
      %p91 = scmp.ne.s32.totalorder %s83, %s85
      %p92 = scmp.eq.s32.totalorder %s28, 1
      %p93 = por %p91, %p92
      %p94 = scmp.ne.s32.totalorder %s85, %s86
      %p95 = scmp.eq.s32.totalorder %s28, 0
      %p96 = por %p94, %p95
      %p97 = scmp.ne.s32.totalorder %s85, %s86
      %p98 = scmp.eq.s32.totalorder %s29, 1
      %p99 = por %p97, %p98
      %p101 = scmp.ne.s32.totalorder %s86, %s100
      %p102 = scmp.eq.s32.totalorder %s29, 0
      %p103 = por %p101, %p102
      %s104 = ssub.s32 %s23, %s30
      %p105 = scmp.eq.s32.totalorder %s104, 0
      %s107 = sadd.s32 %s106, 1
      %s108 = scalar_select %p105, %s106, %s107
      %p111 = pneg %p105
      %p112 = scmp.eq.s32.totalorder %s23, 1
      %p113 = por %p111, %p112
      %p114 = scmp.ne.s32.totalorder %s106, %s109
      %p115 = scmp.eq.s32.totalorder %s23, 0
      %p116 = por %p114, %p115
      %p117 = scmp.ne.s32.totalorder %s106, %s109
      %p118 = scmp.eq.s32.totalorder %s28, 1
      %p119 = por %p117, %p118
      %p120 = scmp.ne.s32.totalorder %s109, %s110
      %p121 = scmp.eq.s32.totalorder %s28, 0
      %p122 = por %p120, %p121
      %p123 = scmp.ne.s32.totalorder %s109, %s110
      %p124 = scmp.eq.s32.totalorder %s29, 1
      %p125 = por %p123, %p124
      %p127 = scmp.ne.s32.totalorder %s110, %s126
      %p128 = scmp.eq.s32.totalorder %s29, 0
      %p129 = por %p127, %p128
      %s130 = ssub.s32 %s23, %s30
      %p131 = scmp.eq.s32.totalorder %s130, 0
      %s133 = sadd.s32 %s132, 1
      %s134 = scalar_select %p131, %s132, %s133
      %p137 = pneg %p131
      %p138 = scmp.eq.s32.totalorder %s23, 1
      %p139 = por %p137, %p138
      %p140 = scmp.ne.s32.totalorder %s132, %s135
      %p141 = scmp.eq.s32.totalorder %s23, 0
      %p142 = por %p140, %p141
      %p143 = scmp.ne.s32.totalorder %s132, %s135
      %p144 = scmp.eq.s32.totalorder %s28, 1
      %p145 = por %p143, %p144
      %p146 = scmp.ne.s32.totalorder %s135, %s136
      %p147 = scmp.eq.s32.totalorder %s28, 0
      %p148 = por %p146, %p147
      %p149 = scmp.ne.s32.totalorder %s135, %s136
      %p150 = scmp.eq.s32.totalorder %s29, 1
      %p151 = por %p149, %p150
      %p153 = scmp.ne.s32.totalorder %s136, %s152
      %p154 = scmp.eq.s32.totalorder %s29, 0
      %p155 = por %p153, %p154
      %p156 = scmp.le.s32.totalorder 1, %s23
      %p157 = scmp.lt.s32.totalorder %s23, 3
      %p158 = pnand %p156, %p157
      %p159 = pneg %p158
      // Predicated region
      $region9: #{tpu_custom_call.1} parent=5 // pred_check
        _
      $region10: #{tpu_custom_call.1} parent=5 // pred_check_branch
        %161 = sbr.rel (%p158) target = $region12
      $region11: #{tpu_custom_call.1} parent=5 // pred_region
        %s162 = ssub.s32 %s23, 1
        // Predicated region
        $region13: #{tpu_custom_call.1} parent=11 // pred_check
          %p163 = pneg %p96
        $region14: #{tpu_custom_call.1} parent=11 // pred_check_branch
          %165 = sbr.rel (%p163) target = $region16
        $region15: #{tpu_custom_call.1} parent=11 // pred_region
          %167 = vsyncadd [#allocation6], 0
          %s169 = sshll.u32 %s2, 4
          %s170 = int_to_ptr.hbm [resolvable:$true] %s169
          %s171 = sshll.u32 [#allocation7], 4
          %s172 = int_to_ptr.vmem [resolvable:$true] %s171
          %174 = dma.hbm_to_vmem [thread:$0]  %s170, 64, %s172, [#allocation6]
        $region16: #{tpu_custom_call.1} parent=11 // pred_fallthru
          _
      $region12: #{tpu_custom_call.1} parent=5 // pred_fallthru
        _
      %p175 = scmp.lt.s32.totalorder %s23, 2
      // Predicated region
      $region17: #{tpu_custom_call.1} parent=5 // pred_check
        %p176 = pneg %p175
      $region18: #{tpu_custom_call.1} parent=5 // pred_check_branch
        %178 = sbr.rel (%p176) target = $region20
      $region19: #{tpu_custom_call.1} parent=5 // pred_region
        // Predicated region
        $region21: #{tpu_custom_call.1} parent=19 // pred_check
          %p179 = pneg %p43
        $region22: #{tpu_custom_call.1} parent=19 // pred_check_branch
          %181 = sbr.rel (%p179) target = $region24
        $region23: #{tpu_custom_call.1} parent=19 // pred_region
          %s182 = sand.u32 %s33, 1
          %s183 = scalar_lea.sflag [#allocation3], %s182
          %s184 = sand.u32 %s33, 1
          %s185 = smul.addr %s184, 2
          %s186 = scalar_lea.vmem [#allocation2], %s185
          %188 = vsyncadd %s183, 0
          %s189 = smul.addr %s23, 2
          %s190 = scalar_lea.hbm %s0, %s189
          %s192 = sshll.u32 %s190, 4
          %s193 = int_to_ptr.hbm [resolvable:$true] %s192
          %s194 = sshll.u32 %s186, 4
          %s195 = int_to_ptr.vmem [resolvable:$true] %s194
          %197 = dma.hbm_to_vmem [thread:$0]  %s193, 32, %s195, %s183
        $region24: #{tpu_custom_call.1} parent=19 // pred_fallthru
          _
        // Predicated region
        $region25: #{tpu_custom_call.1} parent=19 // pred_check
          %p198 = pneg %p69
        $region26: #{tpu_custom_call.1} parent=19 // pred_check_branch
          %200 = sbr.rel (%p198) target = $region28
        $region27: #{tpu_custom_call.1} parent=19 // pred_region
          %s201 = sand.u32 %s23, 1
          %s202 = scalar_lea.sflag [#allocation6], %s201
          %s203 = sand.u32 %s59, 1
          %s204 = smul.addr %s203, 8
          %s205 = scalar_lea.vmem [#allocation5], %s204
          %207 = vsyncadd %s202, 0
          %s208 = smul.addr %s23, 2
          %s209 = smul.addr %s208, 4
          %s210 = scalar_lea.hbm %s1, %s209
          %s212 = sshll.u32 %s210, 4
          %s213 = int_to_ptr.hbm [resolvable:$true] %s212
          %s214 = sshll.u32 %s205, 4
          %s215 = int_to_ptr.vmem [resolvable:$true] %s214
          %217 = dma.hbm_to_vmem [thread:$0]  %s213, 128, %s215, %s202
        $region28: #{tpu_custom_call.1} parent=19 // pred_fallthru
          _
      $region20: #{tpu_custom_call.1} parent=5 // pred_fallthru
        _
      %p218 = scmp.le.s32.totalorder 1, %s23
      %p219 = scmp.lt.s32.totalorder %s23, 3
      %p220 = pnand %p218, %p219
      %p221 = pneg %p220
      // Predicated region
      $region29: #{tpu_custom_call.1} parent=5 // pred_check
        _
      $region30: #{tpu_custom_call.1} parent=5 // pred_check_branch
        %223 = sbr.rel (%p220) target = $region32
      $region31: #{tpu_custom_call.1} parent=5 // pred_region
        %s224 = ssub.s32 %s23, 1
        %s225 = sand.u32 %s36, 1
        %s226 = scalar_lea.sflag [#allocation3], %s225
        %s227 = sand.u32 %s36, 1
        %s228 = smul.addr %s227, 2
        %s229 = scalar_lea.vmem [#allocation2], %s228
        // Predicated region
        $region33: #{tpu_custom_call.1} parent=31 // pred_check
          %p230 = pneg %p49
        $region34: #{tpu_custom_call.1} parent=31 // pred_check_branch
          %232 = sbr.rel (%p230) target = $region36
        $region35: #{tpu_custom_call.1} parent=31 // pred_region
          %234 = dma.done %s226, 32
        $region36: #{tpu_custom_call.1} parent=31 // pred_fallthru
          _
        %s235 = sand.u32 %s28, 1
        %s236 = scalar_lea.sflag [#allocation6], %s235
        %s237 = sand.u32 %s62, 1
        %s238 = smul.addr %s237, 8
        %s239 = scalar_lea.vmem [#allocation5], %s238
        // Predicated region
        $region37: #{tpu_custom_call.1} parent=31 // pred_check
          %p240 = pneg %p75
        $region38: #{tpu_custom_call.1} parent=31 // pred_check_branch
          %242 = sbr.rel (%p240) target = $region40
        $region39: #{tpu_custom_call.1} parent=31 // pred_region
          %244 = dma.done %s236, 128
        $region40: #{tpu_custom_call.1} parent=31 // pred_fallthru
          _
        // Predicated region
        $region41: #{tpu_custom_call.1} parent=31 // pred_check
          %p245 = pneg %p96
        $region42: #{tpu_custom_call.1} parent=31 // pred_check_branch
          %247 = sbr.rel (%p245) target = $region44
        $region43: #{tpu_custom_call.1} parent=31 // pred_region
          %249 = dma.done [#allocation6], 64
        $region44: #{tpu_custom_call.1} parent=31 // pred_fallthru
          _
        %s250 = sand.u32 %s36, 1
        %s251 = scalar_lea.sflag [#allocation3], %s250
        %s252 = sand.u32 %s36, 1
        %s253 = smul.addr %s252, 2
        %s254 = scalar_lea.vmem [#allocation2], %s253
        %p255 = pneg %p49
        %p256 = pneg %p46
        %s257 = sand.u32 %s28, 1
        %s258 = scalar_lea.sflag [#allocation6], %s257
        %s259 = sand.u32 %s62, 1
        %s260 = smul.addr %s259, 8
        %s261 = scalar_lea.vmem [#allocation5], %s260
        %p262 = pneg %p75
        %p263 = pneg %p72
        %p264 = pneg %p96
        %p265 = pneg %p93
        %p266 = pneg %p122
        %p267 = pneg %p119
        %s268 = sand.u32 %s109, 1
        %s269 = scalar_lea.sflag [#allocation4], %s268
        %s270 = sand.u32 %s109, 1
        %s271 = smul.addr %s270, 4
        %s272 = scalar_lea.vmem [#allocation8], %s271
        %p273 = pneg %p148
        %p274 = pneg %p145
        %s275 = sand.u32 %s135, 1
        %s276 = scalar_lea.sflag [#allocation10], %s275
        %s277 = sand.u32 %s135, 1
        %s278 = smul.addr %s277, 2
        %s279 = scalar_lea.vmem [#allocation9], %s278
        %v280 = vld [vmem:[%s229] sm:$0x3]
        %v281 = vlaneseq
        %v282 = vand.u32 %v281, 127
        %v283 = vadd.s32 %v282, 128
        %v285 = vperm.slane %v280, 0
        %v286 = vperm.slane %v280, 1
        %vm289 = vcmask 1040384
        %v290 = vsel %vm289, %v285, -inf
        %v291 = vsel %vm289, %v286, -inf
        %v292 = vmax.f32 %v290, %v291
        %293 = vmax.xlane.f32.xlu0 %v292
        %v294 = vpop.xlane.xlu0 %293
        %v296 = vperm.slane %v294, 0
        %vm298 = vcmp.eq.f32.partialorder %v280, %v296
        %v299 = vrot.slane %v283, 7
        %v300 = vsel %vm289, %v282, %v299
        %v301 = vsel %vm298, %v300, 256
        %v302 = vperm.slane %v301, 0
        %v303 = vperm.slane %v301, 1
        %v304 = vsel %vm289, %v302, 2147483647
        %v305 = vsel %vm289, %v303, 2147483647
        %vm306 = vcmp.lt.s32.totalorder %v304, %v305
        %v307 = vsel %vm306, %v304, %v305
        %v308 = vand.u32 %v307, 65535
        %v309 = vshra.s32 %v307, 16
        %v310 = vcvt.s32.f32 %v308
        %v311 = vcvt.s32.f32 %v309
        %312 = vmin.xlane.f32.xlu0 %v311
        %v313 = vpop.xlane.xlu0 %312
        %vm314 = vcmp.eq.f32.partialorder %v311, %v313
        %v315 = vsel %vm314, %v310, inf
        %316 = vmin.xlane.f32.xlu0 %v315
        %v317 = vpop.xlane.xlu0 %316
        %v318 = vcvt.f32.s32 %v317
        %v319 = vcvt.f32.s32 %v313
        %v320 = vshll.u32 %v319, 16
        %v321 = vadd.s32 %v320, %v318
        %vm322 = vcmp.eq.s32.totalorder %v282, %v321
        %vm323 = vcmp.eq.s32.totalorder %v283, %v321
        %v324 = vsel %vm322, -inf, %v285
        %v325 = vsel %vm323, -inf, %v286
        %v326 = vsel %vm289, %v324, -inf
        %v327 = vsel %vm289, %v325, -inf
        %v328 = vmax.f32 %v326, %v327
        %329 = vmax.xlane.f32.xlu0 %v328
        %v330 = vpop.xlane.xlu0 %329
        %vm331 = vcmp.eq.f32.partialorder %v324, %v330
        %vm332 = vcmp.eq.f32.partialorder %v325, %v330
        %v333 = vsel %vm331, %v282, 256
        %v334 = vsel %vm332, %v283, 256
        %v335 = vsel %vm289, %v333, 2147483647
        %v336 = vsel %vm289, %v334, 2147483647
        %vm337 = vcmp.lt.s32.totalorder %v335, %v336
        %v338 = vsel %vm337, %v335, %v336
        %v339 = vand.u32 %v338, 65535
        %v340 = vshra.s32 %v338, 16
        %v341 = vcvt.s32.f32 %v339
        %v342 = vcvt.s32.f32 %v340
        %343 = vmin.xlane.f32.xlu0 %v342
        %v344 = vpop.xlane.xlu0 %343
        %vm345 = vcmp.eq.f32.partialorder %v342, %v344
        %v346 = vsel %vm345, %v341, inf
        %347 = vmin.xlane.f32.xlu0 %v346
        %v348 = vpop.xlane.xlu0 %347
        %v349 = vcvt.f32.s32 %v348
        %v350 = vcvt.f32.s32 %v344
        %v351 = vshll.u32 %v350, 16
        %v352 = vadd.s32 %v351, %v349
        %vm353 = vcmp.eq.s32.totalorder %v282, %v352
        %vm354 = vcmp.eq.s32.totalorder %v283, %v352
        %v355 = vsel %vm353, -inf, %v324
        %v356 = vsel %vm354, -inf, %v325
        %v357 = vsel %vm289, %v355, -inf
        %v358 = vsel %vm289, %v356, -inf
        %v359 = vmax.f32 %v357, %v358
        %360 = vmax.xlane.f32.xlu0 %v359
        %v361 = vpop.xlane.xlu0 %360
        %vm362 = vcmp.eq.f32.partialorder %v355, %v361
        %vm363 = vcmp.eq.f32.partialorder %v356, %v361
        %v364 = vsel %vm362, %v282, 256
        %v365 = vsel %vm363, %v283, 256
        %v366 = vsel %vm289, %v364, 2147483647
        %v367 = vsel %vm289, %v365, 2147483647
        %vm368 = vcmp.lt.s32.totalorder %v366, %v367
        %v369 = vsel %vm368, %v366, %v367
        %v370 = vand.u32 %v369, 65535
        %v371 = vshra.s32 %v369, 16
        %v372 = vcvt.s32.f32 %v370
        %v373 = vcvt.s32.f32 %v371
        %374 = vmin.xlane.f32.xlu0 %v373
        %v375 = vpop.xlane.xlu0 %374
        %vm376 = vcmp.eq.f32.partialorder %v373, %v375
        %v377 = vsel %vm376, %v372, inf
        %378 = vmin.xlane.f32.xlu0 %v377
        %v379 = vpop.xlane.xlu0 %378
        %v380 = vcvt.f32.s32 %v379
        %v381 = vcvt.f32.s32 %v375
        %v382 = vshll.u32 %v381, 16
        %v383 = vadd.s32 %v382, %v380
        %vm384 = vcmp.eq.s32.totalorder %v282, %v383
        %vm385 = vcmp.eq.s32.totalorder %v283, %v383
        %v386 = vsel %vm384, -inf, %v355
        %v387 = vsel %vm385, -inf, %v356
        %v388 = vsel %vm289, %v386, -inf
        %v389 = vsel %vm289, %v387, -inf
        %v390 = vmax.f32 %v388, %v389
        %391 = vmax.xlane.f32.xlu0 %v390
        %v392 = vpop.xlane.xlu0 %391
        %vm393 = vcmp.eq.f32.partialorder %v386, %v392
        %vm394 = vcmp.eq.f32.partialorder %v387, %v392
        %v395 = vsel %vm393, %v282, 256
        %v396 = vsel %vm394, %v283, 256
        %v397 = vsel %vm289, %v395, 2147483647
        %v398 = vsel %vm289, %v396, 2147483647
        %vm399 = vcmp.lt.s32.totalorder %v397, %v398
        %v400 = vsel %vm399, %v397, %v398
        %v401 = vand.u32 %v400, 65535
        %v402 = vshra.s32 %v400, 16
        %v403 = vcvt.s32.f32 %v401
        %v404 = vcvt.s32.f32 %v402
        %405 = vmin.xlane.f32.xlu0 %v404
        %v406 = vpop.xlane.xlu0 %405
        %vm407 = vcmp.eq.f32.partialorder %v404, %v406
        %v408 = vsel %vm407, %v403, inf
        %409 = vmin.xlane.f32.xlu0 %v408
        %v410 = vpop.xlane.xlu0 %409
        %v411 = vcvt.f32.s32 %v410
        %v412 = vcvt.f32.s32 %v406
        %v413 = vshll.u32 %v412, 16
        %v414 = vadd.s32 %v413, %v411
        %vm415 = vcmask 7168
        %v416 = vsel %vm415, %v321, %v352
        %vm417 = vcmask 15360
        %v418 = vsel %vm417, %v416, %v383
        %vm419 = vcmask 23552
        %v420 = vsel %vm419, %v418, %v414
        %vm421 = vcmask 31744
        %v422 = vsel %vm421, %v420, 4294967295
        %v423 = vperm.slane %v422, 0
        %v424 = vlaneseq
        %v425 = vshrl.u32 %v424, 7
        %427 = vset.pattern.permute.xlu0 %v425
        %428 = vperm.xlu0 %427, %v423
        %v429 = vpop.permute.xlu0 %428
        %v430 = vlaneseq
        %v431 = vshrl.u32 %v430, 7
        %v432 = vadd.s32 %v431, 8
        %433 = vset.pattern.permute.xlu0 %v432
        %434 = vperm.xlu0 %433, %v423
        %v435 = vpop.permute.xlu0 %434
        %v436 = vlaneseq
        %v437 = vshrl.u32 %v436, 7
        %v438 = vadd.s32 %v437, 16
        %439 = vset.pattern.permute.xlu0 %v438
        %440 = vperm.xlu0 %439, %v423
        %v441 = vpop.permute.xlu0 %440
        %v442 = vlaneseq
        %v443 = vshrl.u32 %v442, 7
        %v444 = vadd.s32 %v443, 24
        %445 = vset.pattern.permute.xlu0 %v444
        %446 = vperm.xlu0 %445, %v423
        %v447 = vpop.permute.xlu0 %446
        %v448 = vlaneseq
        %v449 = vshrl.u32 %v448, 7
        %v450 = vadd.s32 %v449, 32
        %451 = vset.pattern.permute.xlu0 %v450
        %452 = vperm.xlu0 %451, %v423
        %v453 = vpop.permute.xlu0 %452
        %v454 = vlaneseq
        %v455 = vshrl.u32 %v454, 7
        %v456 = vadd.s32 %v455, 40
        %457 = vset.pattern.permute.xlu0 %v456
        %458 = vperm.xlu0 %457, %v423
        %v459 = vpop.permute.xlu0 %458
        %v460 = vlaneseq
        %v461 = vshrl.u32 %v460, 7
        %v462 = vadd.s32 %v461, 48
        %463 = vset.pattern.permute.xlu0 %v462
        %464 = vperm.xlu0 %463, %v423
        %v465 = vpop.permute.xlu0 %464
        %v466 = vlaneseq
        %v467 = vshrl.u32 %v466, 7
        %v468 = vadd.s32 %v467, 56
        %469 = vset.pattern.permute.xlu0 %v468
        %470 = vperm.xlu0 %469, %v423
        %v471 = vpop.permute.xlu0 %470
        %v472 = vlaneseq
        %v473 = vshrl.u32 %v472, 7
        %v474 = vadd.s32 %v473, 64
        %475 = vset.pattern.permute.xlu0 %v474
        %476 = vperm.xlu0 %475, %v423
        %v477 = vpop.permute.xlu0 %476
        %v478 = vlaneseq
        %v479 = vshrl.u32 %v478, 7
        %v480 = vadd.s32 %v479, 72
        %481 = vset.pattern.permute.xlu0 %v480
        %482 = vperm.xlu0 %481, %v423
        %v483 = vpop.permute.xlu0 %482
        %v484 = vlaneseq
        %v485 = vshrl.u32 %v484, 7
        %v486 = vadd.s32 %v485, 80
        %487 = vset.pattern.permute.xlu0 %v486
        %488 = vperm.xlu0 %487, %v423
        %v489 = vpop.permute.xlu0 %488
        %v490 = vlaneseq
        %v491 = vshrl.u32 %v490, 7
        %v492 = vadd.s32 %v491, 88
        %493 = vset.pattern.permute.xlu0 %v492
        %494 = vperm.xlu0 %493, %v423
        %v495 = vpop.permute.xlu0 %494
        %v496 = vlaneseq
        %v497 = vshrl.u32 %v496, 7
        %v498 = vadd.s32 %v497, 96
        %499 = vset.pattern.permute.xlu0 %v498
        %500 = vperm.xlu0 %499, %v423
        %v501 = vpop.permute.xlu0 %500
        %v502 = vlaneseq
        %v503 = vshrl.u32 %v502, 7
        %v504 = vadd.s32 %v503, 104
        %505 = vset.pattern.permute.xlu0 %v504
        %506 = vperm.xlu0 %505, %v423
        %v507 = vpop.permute.xlu0 %506
        %v508 = vlaneseq
        %v509 = vshrl.u32 %v508, 7
        %v510 = vadd.s32 %v509, 112
        %511 = vset.pattern.permute.xlu0 %v510
        %512 = vperm.xlu0 %511, %v423
        %v513 = vpop.permute.xlu0 %512
        %v514 = vlaneseq
        %v515 = vshrl.u32 %v514, 7
        %v516 = vadd.s32 %v515, 120
        %517 = vset.pattern.permute.xlu0 %v516
        %518 = vperm.xlu0 %517, %v423
        %v519 = vpop.permute.xlu0 %518
        %vm520 = vcmp.eq.s32.totalorder %v429, %v282
        %vm521 = vcmp.eq.s32.totalorder %v429, %v283
        %vm522 = vcmp.eq.s32.totalorder %v435, %v282
        %vm523 = vcmp.eq.s32.totalorder %v435, %v283
        %vm524 = vcmp.eq.s32.totalorder %v441, %v282
        %vm525 = vcmp.eq.s32.totalorder %v441, %v283
        %vm526 = vcmp.eq.s32.totalorder %v447, %v282
        %vm527 = vcmp.eq.s32.totalorder %v447, %v283
        %vm528 = vcmp.eq.s32.totalorder %v453, %v282
        %vm529 = vcmp.eq.s32.totalorder %v453, %v283
        %vm530 = vcmp.eq.s32.totalorder %v459, %v282
        %vm531 = vcmp.eq.s32.totalorder %v459, %v283
        %vm532 = vcmp.eq.s32.totalorder %v465, %v282
        %vm533 = vcmp.eq.s32.totalorder %v465, %v283
        %vm534 = vcmp.eq.s32.totalorder %v471, %v282
        %vm535 = vcmp.eq.s32.totalorder %v471, %v283
        %vm536 = vcmp.eq.s32.totalorder %v477, %v282
        %vm537 = vcmp.eq.s32.totalorder %v477, %v283
        %vm538 = vcmp.eq.s32.totalorder %v483, %v282
        %vm539 = vcmp.eq.s32.totalorder %v483, %v283
        %vm540 = vcmp.eq.s32.totalorder %v489, %v282
        %vm541 = vcmp.eq.s32.totalorder %v489, %v283
        %vm542 = vcmp.eq.s32.totalorder %v495, %v282
        %vm543 = vcmp.eq.s32.totalorder %v495, %v283
        %vm544 = vcmp.eq.s32.totalorder %v501, %v282
        %vm545 = vcmp.eq.s32.totalorder %v501, %v283
        %vm546 = vcmp.eq.s32.totalorder %v507, %v282
        %vm547 = vcmp.eq.s32.totalorder %v507, %v283
        %vm548 = vcmp.eq.s32.totalorder %v513, %v282
        %vm549 = vcmp.eq.s32.totalorder %v513, %v283
        %vm550 = vcmp.eq.s32.totalorder %v519, %v282
        %vm551 = vcmp.eq.s32.totalorder %v519, %v283
        %v552 = vsel %vm520, 1, 0
        %v553 = vsel %vm521, 1, 0
        %v554 = vsel %vm522, 1, 0
        %v555 = vsel %vm523, 1, 0
        %v556 = vsel %vm524, 1, 0
        %v557 = vsel %vm525, 1, 0
        %v558 = vsel %vm526, 1, 0
        %v559 = vsel %vm527, 1, 0
        %v560 = vsel %vm528, 1, 0
        %v561 = vsel %vm529, 1, 0
        %v562 = vsel %vm530, 1, 0
        %v563 = vsel %vm531, 1, 0
        %v564 = vsel %vm532, 1, 0
        %v565 = vsel %vm533, 1, 0
        %v566 = vsel %vm534, 1, 0
        %v567 = vsel %vm535, 1, 0
        %v568 = vsel %vm536, 1, 0
        %v569 = vsel %vm537, 1, 0
        %v570 = vsel %vm538, 1, 0
        %v571 = vsel %vm539, 1, 0
        %v572 = vsel %vm540, 1, 0
        %v573 = vsel %vm541, 1, 0
        %v574 = vsel %vm542, 1, 0
        %v575 = vsel %vm543, 1, 0
        %v576 = vsel %vm544, 1, 0
        %v577 = vsel %vm545, 1, 0
        %v578 = vsel %vm546, 1, 0
        %v579 = vsel %vm547, 1, 0
        %v580 = vsel %vm548, 1, 0
        %v581 = vsel %vm549, 1, 0
        %v582 = vsel %vm550, 1, 0
        %v583 = vsel %vm551, 1, 0
        %v584 = vcvt.s32.f32 %v552
        %v585 = vcvt.s32.f32 %v553
        %v586 = vcvt.s32.f32 %v554
        %v587 = vcvt.s32.f32 %v555
        %v588 = vcvt.s32.f32 %v556
        %v589 = vcvt.s32.f32 %v557
        %v590 = vcvt.s32.f32 %v558
        %v591 = vcvt.s32.f32 %v559
        %v592 = vcvt.s32.f32 %v560
        %v593 = vcvt.s32.f32 %v561
        %v594 = vcvt.s32.f32 %v562
        %v595 = vcvt.s32.f32 %v563
        %v596 = vcvt.s32.f32 %v564
        %v597 = vcvt.s32.f32 %v565
        %v598 = vcvt.s32.f32 %v566
        %v599 = vcvt.s32.f32 %v567
        %v600 = vcvt.s32.f32 %v568
        %v601 = vcvt.s32.f32 %v569
        %v602 = vcvt.s32.f32 %v570
        %v603 = vcvt.s32.f32 %v571
        %v604 = vcvt.s32.f32 %v572
        %v605 = vcvt.s32.f32 %v573
        %v606 = vcvt.s32.f32 %v574
        %v607 = vcvt.s32.f32 %v575
        %v608 = vcvt.s32.f32 %v576
        %v609 = vcvt.s32.f32 %v577
        %v610 = vcvt.s32.f32 %v578
        %v611 = vcvt.s32.f32 %v579
        %v612 = vcvt.s32.f32 %v580
        %v613 = vcvt.s32.f32 %v581
        %v614 = vcvt.s32.f32 %v582
        %v615 = vcvt.s32.f32 %v583
        %v616 = vld [vmem:[%s239] sm:$0xff]
        %618 = vst [vmem:[#allocation1] ss:$2 sm:$0xff] %v616
        %v619 = vld.sshfl [vmem:[#allocation1] sm:$0xff pattern:$0x75316420]
        %v620 = vld.sshfl [vmem:[#allocation1 + $0x8] sm:$0xff pattern:$0x75316420]
        %v623 = vand.u32 %v614, 4294901760
        %624 = vmatpush.xpose.msra.mxu0 %v623
        %v625 = vand.u32 %v612, 4294901760
        %626 = vmatpush.xpose.msra.mxu0 %v625
        %v627 = vand.u32 %v610, 4294901760
        %628 = vmatpush.xpose.msra.mxu0 %v627
        %v629 = vand.u32 %v608, 4294901760
        %630 = vmatpush.xpose.msra.mxu0 %v629
        %v631 = vand.u32 %v606, 4294901760
        %632 = vmatpush.xpose.msra.mxu0 %v631
        %v633 = vand.u32 %v604, 4294901760
        %634 = vmatpush.xpose.msra.mxu0 %v633
        %v635 = vand.u32 %v602, 4294901760
        %636 = vmatpush.xpose.msra.mxu0 %v635
        %v637 = vand.u32 %v600, 4294901760
        %638 = vmatpush.xpose.msra.mxu0 %v637
        %v639 = vand.u32 %v598, 4294901760
        %640 = vmatpush.xpose.msra.mxu0 %v639
        %v641 = vand.u32 %v596, 4294901760
        %642 = vmatpush.xpose.msra.mxu0 %v641
        %v643 = vand.u32 %v594, 4294901760
        %644 = vmatpush.xpose.msra.mxu0 %v643
        %v645 = vand.u32 %v592, 4294901760
        %646 = vmatpush.xpose.msra.mxu0 %v645
        %v647 = vand.u32 %v590, 4294901760
        %648 = vmatpush.xpose.msra.mxu0 %v647
        %v649 = vand.u32 %v588, 4294901760
        %650 = vmatpush.xpose.msra.mxu0 %v649
        %v651 = vand.u32 %v586, 4294901760
        %652 = vmatpush.xpose.msra.mxu0 %v651
        %v653 = vand.u32 %v584, 4294901760
        %654 = vmatpush.xpose.msra.mxu0 %v653
        %v655 = vand.u32 %v619, 4294901760
        %v656 = vsub.f32 %v619, %v655
        %v657 = vand.u32 %v656, 4294901760
        %v658 = vsub.f32 %v656, %v657
        %v659 = vand.u32 %v658, 4294901760
        %660 = vmatmul.f32.gmra.mxu0 %v659
        %v661 = vpop.f32.mrf.mxu0
        %v662 = vadd.f32 0.0, %v661
        %663 = vdwg.mxu0
        %v664 = vand.u32 %v614, 4294901760
        %v665 = vsub.f32 %v614, %v664
        %v666 = vand.u32 %v665, 4294901760
        %v667 = vsub.f32 %v665, %v666
        %v668 = vand.u32 %v667, 4294901760
        %669 = vmatpush.xpose.msra.mxu0 %v668
        %v670 = vand.u32 %v612, 4294901760
        %v671 = vsub.f32 %v612, %v670
        %v672 = vand.u32 %v671, 4294901760
        %v673 = vsub.f32 %v671, %v672
        %v674 = vand.u32 %v673, 4294901760
        %675 = vmatpush.xpose.msra.mxu0 %v674
        %v676 = vand.u32 %v610, 4294901760
        %v677 = vsub.f32 %v610, %v676
        %v678 = vand.u32 %v677, 4294901760
        %v679 = vsub.f32 %v677, %v678
        %v680 = vand.u32 %v679, 4294901760
        %681 = vmatpush.xpose.msra.mxu0 %v680
        %v682 = vand.u32 %v608, 4294901760
        %v683 = vsub.f32 %v608, %v682
        %v684 = vand.u32 %v683, 4294901760
        %v685 = vsub.f32 %v683, %v684
        %v686 = vand.u32 %v685, 4294901760
        %687 = vmatpush.xpose.msra.mxu0 %v686
        %v688 = vand.u32 %v606, 4294901760
        %v689 = vsub.f32 %v606, %v688
        %v690 = vand.u32 %v689, 4294901760
        %v691 = vsub.f32 %v689, %v690
        %v692 = vand.u32 %v691, 4294901760
        %693 = vmatpush.xpose.msra.mxu0 %v692
        %v694 = vand.u32 %v604, 4294901760
        %v695 = vsub.f32 %v604, %v694
        %v696 = vand.u32 %v695, 4294901760
        %v697 = vsub.f32 %v695, %v696
        %v698 = vand.u32 %v697, 4294901760
        %699 = vmatpush.xpose.msra.mxu0 %v698
        %v700 = vand.u32 %v602, 4294901760
        %v701 = vsub.f32 %v602, %v700
        %v702 = vand.u32 %v701, 4294901760
        %v703 = vsub.f32 %v701, %v702
        %v704 = vand.u32 %v703, 4294901760
        %705 = vmatpush.xpose.msra.mxu0 %v704
        %v706 = vand.u32 %v600, 4294901760
        %v707 = vsub.f32 %v600, %v706
        %v708 = vand.u32 %v707, 4294901760
        %v709 = vsub.f32 %v707, %v708
        %v710 = vand.u32 %v709, 4294901760
        %711 = vmatpush.xpose.msra.mxu0 %v710
        %v712 = vand.u32 %v598, 4294901760
        %v713 = vsub.f32 %v598, %v712
        %v714 = vand.u32 %v713, 4294901760
        %v715 = vsub.f32 %v713, %v714
        %v716 = vand.u32 %v715, 4294901760
        %717 = vmatpush.xpose.msra.mxu0 %v716
        %v718 = vand.u32 %v596, 4294901760
        %v719 = vsub.f32 %v596, %v718
        %v720 = vand.u32 %v719, 4294901760
        %v721 = vsub.f32 %v719, %v720
        %v722 = vand.u32 %v721, 4294901760
        %723 = vmatpush.xpose.msra.mxu0 %v722
        %v724 = vand.u32 %v594, 4294901760
        %v725 = vsub.f32 %v594, %v724
        %v726 = vand.u32 %v725, 4294901760
        %v727 = vsub.f32 %v725, %v726
        %v728 = vand.u32 %v727, 4294901760
        %729 = vmatpush.xpose.msra.mxu0 %v728
        %v730 = vand.u32 %v592, 4294901760
        %v731 = vsub.f32 %v592, %v730
        %v732 = vand.u32 %v731, 4294901760
        %v733 = vsub.f32 %v731, %v732
        %v734 = vand.u32 %v733, 4294901760
        %735 = vmatpush.xpose.msra.mxu0 %v734
        %v736 = vand.u32 %v590, 4294901760
        %v737 = vsub.f32 %v590, %v736
        %v738 = vand.u32 %v737, 4294901760
        %v739 = vsub.f32 %v737, %v738
        %v740 = vand.u32 %v739, 4294901760
        %741 = vmatpush.xpose.msra.mxu0 %v740
        %v742 = vand.u32 %v588, 4294901760
        %v743 = vsub.f32 %v588, %v742
        %v744 = vand.u32 %v743, 4294901760
        %v745 = vsub.f32 %v743, %v744
        %v746 = vand.u32 %v745, 4294901760
        %747 = vmatpush.xpose.msra.mxu0 %v746
        %v748 = vand.u32 %v586, 4294901760
        %v749 = vsub.f32 %v586, %v748
        %v750 = vand.u32 %v749, 4294901760
        %v751 = vsub.f32 %v749, %v750
        %v752 = vand.u32 %v751, 4294901760
        %753 = vmatpush.xpose.msra.mxu0 %v752
        %v754 = vand.u32 %v584, 4294901760
        %v755 = vsub.f32 %v584, %v754
        %v756 = vand.u32 %v755, 4294901760
        %v757 = vsub.f32 %v755, %v756
        %v758 = vand.u32 %v757, 4294901760
        %759 = vmatpush.xpose.msra.mxu0 %v758
        %v760 = vand.u32 %v619, 4294901760
        %761 = vmatmul.f32.gmra.mxu0 %v760
        %v762 = vpop.f32.mrf.mxu0
        %v763 = vadd.f32 %v662, %v762
        %764 = vdwg.mxu0
        %v765 = vand.u32 %v614, 4294901760
        %v766 = vsub.f32 %v614, %v765
        %767 = vmatpush.xpose.msra.mxu0 %v766
        %v768 = vand.u32 %v612, 4294901760
        %v769 = vsub.f32 %v612, %v768
        %770 = vmatpush.xpose.msra.mxu0 %v769
        %v771 = vand.u32 %v610, 4294901760
        %v772 = vsub.f32 %v610, %v771
        %773 = vmatpush.xpose.msra.mxu0 %v772
        %v774 = vand.u32 %v608, 4294901760
        %v775 = vsub.f32 %v608, %v774
        %776 = vmatpush.xpose.msra.mxu0 %v775
        %v777 = vand.u32 %v606, 4294901760
        %v778 = vsub.f32 %v606, %v777
        %779 = vmatpush.xpose.msra.mxu0 %v778
        %v780 = vand.u32 %v604, 4294901760
        %v781 = vsub.f32 %v604, %v780
        %782 = vmatpush.xpose.msra.mxu0 %v781
        %v783 = vand.u32 %v602, 4294901760
        %v784 = vsub.f32 %v602, %v783
        %785 = vmatpush.xpose.msra.mxu0 %v784
        %v786 = vand.u32 %v600, 4294901760
        %v787 = vsub.f32 %v600, %v786
        %788 = vmatpush.xpose.msra.mxu0 %v787
        %v789 = vand.u32 %v598, 4294901760
        %v790 = vsub.f32 %v598, %v789
        %791 = vmatpush.xpose.msra.mxu0 %v790
        %v792 = vand.u32 %v596, 4294901760
        %v793 = vsub.f32 %v596, %v792
        %794 = vmatpush.xpose.msra.mxu0 %v793
        %v795 = vand.u32 %v594, 4294901760
        %v796 = vsub.f32 %v594, %v795
        %797 = vmatpush.xpose.msra.mxu0 %v796
        %v798 = vand.u32 %v592, 4294901760
        %v799 = vsub.f32 %v592, %v798
        %800 = vmatpush.xpose.msra.mxu0 %v799
        %v801 = vand.u32 %v590, 4294901760
        %v802 = vsub.f32 %v590, %v801
        %803 = vmatpush.xpose.msra.mxu0 %v802
        %v804 = vand.u32 %v588, 4294901760
        %v805 = vsub.f32 %v588, %v804
        %806 = vmatpush.xpose.msra.mxu0 %v805
        %v807 = vand.u32 %v586, 4294901760
        %v808 = vsub.f32 %v586, %v807
        %809 = vmatpush.xpose.msra.mxu0 %v808
        %v810 = vand.u32 %v584, 4294901760
        %v811 = vsub.f32 %v584, %v810
        %812 = vmatpush.xpose.msra.mxu0 %v811
        %v813 = vand.u32 %v619, 4294901760
        %v814 = vsub.f32 %v619, %v813
        %815 = vmatmul.f32.gmra.mxu0 %v814
        %v816 = vpop.f32.mrf.mxu0
        %v817 = vadd.f32 %v763, %v816
        %818 = vdwg.mxu0
        %v819 = vand.u32 %v614, 4294901760
        %820 = vmatpush.xpose.msra.mxu0 %v819
        %v821 = vand.u32 %v612, 4294901760
        %822 = vmatpush.xpose.msra.mxu0 %v821
        %v823 = vand.u32 %v610, 4294901760
        %824 = vmatpush.xpose.msra.mxu0 %v823
        %v825 = vand.u32 %v608, 4294901760
        %826 = vmatpush.xpose.msra.mxu0 %v825
        %v827 = vand.u32 %v606, 4294901760
        %828 = vmatpush.xpose.msra.mxu0 %v827
        %v829 = vand.u32 %v604, 4294901760
        %830 = vmatpush.xpose.msra.mxu0 %v829
        %v831 = vand.u32 %v602, 4294901760
        %832 = vmatpush.xpose.msra.mxu0 %v831
        %v833 = vand.u32 %v600, 4294901760
        %834 = vmatpush.xpose.msra.mxu0 %v833
        %v835 = vand.u32 %v598, 4294901760
        %836 = vmatpush.xpose.msra.mxu0 %v835
        %v837 = vand.u32 %v596, 4294901760
        %838 = vmatpush.xpose.msra.mxu0 %v837
        %v839 = vand.u32 %v594, 4294901760
        %840 = vmatpush.xpose.msra.mxu0 %v839
        %v841 = vand.u32 %v592, 4294901760
        %842 = vmatpush.xpose.msra.mxu0 %v841
        %v843 = vand.u32 %v590, 4294901760
        %844 = vmatpush.xpose.msra.mxu0 %v843
        %v845 = vand.u32 %v588, 4294901760
        %846 = vmatpush.xpose.msra.mxu0 %v845
        %v847 = vand.u32 %v586, 4294901760
        %848 = vmatpush.xpose.msra.mxu0 %v847
        %v849 = vand.u32 %v584, 4294901760
        %850 = vmatpush.xpose.msra.mxu0 %v849
        %v851 = vand.u32 %v619, 4294901760
        %v852 = vsub.f32 %v619, %v851
        %v853 = vand.u32 %v852, 4294901760
        %854 = vmatmul.f32.gmra.mxu0 %v853
        %v855 = vpop.f32.mrf.mxu0
        %v856 = vadd.f32 %v817, %v855
        %857 = vdwg.mxu0
        %v858 = vand.u32 %v614, 4294901760
        %v859 = vsub.f32 %v614, %v858
        %v860 = vand.u32 %v859, 4294901760
        %861 = vmatpush.xpose.msra.mxu0 %v860
        %v862 = vand.u32 %v612, 4294901760
        %v863 = vsub.f32 %v612, %v862
        %v864 = vand.u32 %v863, 4294901760
        %865 = vmatpush.xpose.msra.mxu0 %v864
        %v866 = vand.u32 %v610, 4294901760
        %v867 = vsub.f32 %v610, %v866
        %v868 = vand.u32 %v867, 4294901760
        %869 = vmatpush.xpose.msra.mxu0 %v868
        %v870 = vand.u32 %v608, 4294901760
        %v871 = vsub.f32 %v608, %v870
        %v872 = vand.u32 %v871, 4294901760
        %873 = vmatpush.xpose.msra.mxu0 %v872
        %v874 = vand.u32 %v606, 4294901760
        %v875 = vsub.f32 %v606, %v874
        %v876 = vand.u32 %v875, 4294901760
        %877 = vmatpush.xpose.msra.mxu0 %v876
        %v878 = vand.u32 %v604, 4294901760
        %v879 = vsub.f32 %v604, %v878
        %v880 = vand.u32 %v879, 4294901760
        %881 = vmatpush.xpose.msra.mxu0 %v880
        %v882 = vand.u32 %v602, 4294901760
        %v883 = vsub.f32 %v602, %v882
        %v884 = vand.u32 %v883, 4294901760
        %885 = vmatpush.xpose.msra.mxu0 %v884
        %v886 = vand.u32 %v600, 4294901760
        %v887 = vsub.f32 %v600, %v886
        %v888 = vand.u32 %v887, 4294901760
        %889 = vmatpush.xpose.msra.mxu0 %v888
        %v890 = vand.u32 %v598, 4294901760
        %v891 = vsub.f32 %v598, %v890
        %v892 = vand.u32 %v891, 4294901760
        %893 = vmatpush.xpose.msra.mxu0 %v892
        %v894 = vand.u32 %v596, 4294901760
        %v895 = vsub.f32 %v596, %v894
        %v896 = vand.u32 %v895, 4294901760
        %897 = vmatpush.xpose.msra.mxu0 %v896
        %v898 = vand.u32 %v594, 4294901760
        %v899 = vsub.f32 %v594, %v898
        %v900 = vand.u32 %v899, 4294901760
        %901 = vmatpush.xpose.msra.mxu0 %v900
        %v902 = vand.u32 %v592, 4294901760
        %v903 = vsub.f32 %v592, %v902
        %v904 = vand.u32 %v903, 4294901760
        %905 = vmatpush.xpose.msra.mxu0 %v904
        %v906 = vand.u32 %v590, 4294901760
        %v907 = vsub.f32 %v590, %v906
        %v908 = vand.u32 %v907, 4294901760
        %909 = vmatpush.xpose.msra.mxu0 %v908
        %v910 = vand.u32 %v588, 4294901760
        %v911 = vsub.f32 %v588, %v910
        %v912 = vand.u32 %v911, 4294901760
        %913 = vmatpush.xpose.msra.mxu0 %v912
        %v914 = vand.u32 %v586, 4294901760
        %v915 = vsub.f32 %v586, %v914
        %v916 = vand.u32 %v915, 4294901760
        %917 = vmatpush.xpose.msra.mxu0 %v916
        %v918 = vand.u32 %v584, 4294901760
        %v919 = vsub.f32 %v584, %v918
        %v920 = vand.u32 %v919, 4294901760
        %921 = vmatpush.xpose.msra.mxu0 %v920
        %v922 = vand.u32 %v619, 4294901760
        %923 = vmatmul.f32.gmra.mxu0 %v922
        %v924 = vpop.f32.mrf.mxu0
        %v925 = vadd.f32 %v856, %v924
        %926 = vdwg.mxu0
        %v927 = vand.u32 %v614, 4294901760
        %928 = vmatpush.xpose.msra.mxu0 %v927
        %v929 = vand.u32 %v612, 4294901760
        %930 = vmatpush.xpose.msra.mxu0 %v929
        %v931 = vand.u32 %v610, 4294901760
        %932 = vmatpush.xpose.msra.mxu0 %v931
        %v933 = vand.u32 %v608, 4294901760
        %934 = vmatpush.xpose.msra.mxu0 %v933
        %v935 = vand.u32 %v606, 4294901760
        %936 = vmatpush.xpose.msra.mxu0 %v935
        %v937 = vand.u32 %v604, 4294901760
        %938 = vmatpush.xpose.msra.mxu0 %v937
        %v939 = vand.u32 %v602, 4294901760
        %940 = vmatpush.xpose.msra.mxu0 %v939
        %v941 = vand.u32 %v600, 4294901760
        %942 = vmatpush.xpose.msra.mxu0 %v941
        %v943 = vand.u32 %v598, 4294901760
        %944 = vmatpush.xpose.msra.mxu0 %v943
        %v945 = vand.u32 %v596, 4294901760
        %946 = vmatpush.xpose.msra.mxu0 %v945
        %v947 = vand.u32 %v594, 4294901760
        %948 = vmatpush.xpose.msra.mxu0 %v947
        %v949 = vand.u32 %v592, 4294901760
        %950 = vmatpush.xpose.msra.mxu0 %v949
        %v951 = vand.u32 %v590, 4294901760
        %952 = vmatpush.xpose.msra.mxu0 %v951
        %v953 = vand.u32 %v588, 4294901760
        %954 = vmatpush.xpose.msra.mxu0 %v953
        %v955 = vand.u32 %v586, 4294901760
        %956 = vmatpush.xpose.msra.mxu0 %v955
        %v957 = vand.u32 %v584, 4294901760
        %958 = vmatpush.xpose.msra.mxu0 %v957
        %v959 = vand.u32 %v619, 4294901760
        %960 = vmatmul.f32.gmra.mxu0 %v959
        %v961 = vpop.f32.mrf.mxu0
        %v962 = vadd.f32 %v925, %v961
        %963 = vdwg.mxu0
        %v964 = vand.u32 %v615, 4294901760
        %965 = vmatpush.xpose.msra.mxu0 %v964
        %v966 = vand.u32 %v613, 4294901760
        %967 = vmatpush.xpose.msra.mxu0 %v966
        %v968 = vand.u32 %v611, 4294901760
        %969 = vmatpush.xpose.msra.mxu0 %v968
        %v970 = vand.u32 %v609, 4294901760
        %971 = vmatpush.xpose.msra.mxu0 %v970
        %v972 = vand.u32 %v607, 4294901760
        %973 = vmatpush.xpose.msra.mxu0 %v972
        %v974 = vand.u32 %v605, 4294901760
        %975 = vmatpush.xpose.msra.mxu0 %v974
        %v976 = vand.u32 %v603, 4294901760
        %977 = vmatpush.xpose.msra.mxu0 %v976
        %v978 = vand.u32 %v601, 4294901760
        %979 = vmatpush.xpose.msra.mxu0 %v978
        %v980 = vand.u32 %v599, 4294901760
        %981 = vmatpush.xpose.msra.mxu0 %v980
        %v982 = vand.u32 %v597, 4294901760
        %983 = vmatpush.xpose.msra.mxu0 %v982
        %v984 = vand.u32 %v595, 4294901760
        %985 = vmatpush.xpose.msra.mxu0 %v984
        %v986 = vand.u32 %v593, 4294901760
        %987 = vmatpush.xpose.msra.mxu0 %v986
        %v988 = vand.u32 %v591, 4294901760
        %989 = vmatpush.xpose.msra.mxu0 %v988
        %v990 = vand.u32 %v589, 4294901760
        %991 = vmatpush.xpose.msra.mxu0 %v990
        %v992 = vand.u32 %v587, 4294901760
        %993 = vmatpush.xpose.msra.mxu0 %v992
        %v994 = vand.u32 %v585, 4294901760
        %995 = vmatpush.xpose.msra.mxu0 %v994
        %v996 = vand.u32 %v620, 4294901760
        %v997 = vsub.f32 %v620, %v996
        %v998 = vand.u32 %v997, 4294901760
        %v999 = vsub.f32 %v997, %v998
        %v1000 = vand.u32 %v999, 4294901760
        %1001 = vmatmul.f32.gmra.mxu0 %v1000
        %v1002 = vpop.f32.mrf.mxu0
        %v1003 = vadd.f32 %v962, %v1002
        %1004 = vdwg.mxu0
        %v1005 = vand.u32 %v615, 4294901760
        %v1006 = vsub.f32 %v615, %v1005
        %v1007 = vand.u32 %v1006, 4294901760
        %v1008 = vsub.f32 %v1006, %v1007
        %v1009 = vand.u32 %v1008, 4294901760
        %1010 = vmatpush.xpose.msra.mxu0 %v1009
        %v1011 = vand.u32 %v613, 4294901760
        %v1012 = vsub.f32 %v613, %v1011
        %v1013 = vand.u32 %v1012, 4294901760
        %v1014 = vsub.f32 %v1012, %v1013
        %v1015 = vand.u32 %v1014, 4294901760
        %1016 = vmatpush.xpose.msra.mxu0 %v1015
        %v1017 = vand.u32 %v611, 4294901760
        %v1018 = vsub.f32 %v611, %v1017
        %v1019 = vand.u32 %v1018, 4294901760
        %v1020 = vsub.f32 %v1018, %v1019
        %v1021 = vand.u32 %v1020, 4294901760
        %1022 = vmatpush.xpose.msra.mxu0 %v1021
        %v1023 = vand.u32 %v609, 4294901760
        %v1024 = vsub.f32 %v609, %v1023
        %v1025 = vand.u32 %v1024, 4294901760
        %v1026 = vsub.f32 %v1024, %v1025
        %v1027 = vand.u32 %v1026, 4294901760
        %1028 = vmatpush.xpose.msra.mxu0 %v1027
        %v1029 = vand.u32 %v607, 4294901760
        %v1030 = vsub.f32 %v607, %v1029
        %v1031 = vand.u32 %v1030, 4294901760
        %v1032 = vsub.f32 %v1030, %v1031
        %v1033 = vand.u32 %v1032, 4294901760
        %1034 = vmatpush.xpose.msra.mxu0 %v1033
        %v1035 = vand.u32 %v605, 4294901760
        %v1036 = vsub.f32 %v605, %v1035
        %v1037 = vand.u32 %v1036, 4294901760
        %v1038 = vsub.f32 %v1036, %v1037
        %v1039 = vand.u32 %v1038, 4294901760
        %1040 = vmatpush.xpose.msra.mxu0 %v1039
        %v1041 = vand.u32 %v603, 4294901760
        %v1042 = vsub.f32 %v603, %v1041
        %v1043 = vand.u32 %v1042, 4294901760
        %v1044 = vsub.f32 %v1042, %v1043
        %v1045 = vand.u32 %v1044, 4294901760
        %1046 = vmatpush.xpose.msra.mxu0 %v1045
        %v1047 = vand.u32 %v601, 4294901760
        %v1048 = vsub.f32 %v601, %v1047
        %v1049 = vand.u32 %v1048, 4294901760
        %v1050 = vsub.f32 %v1048, %v1049
        %v1051 = vand.u32 %v1050, 4294901760
        %1052 = vmatpush.xpose.msra.mxu0 %v1051
        %v1053 = vand.u32 %v599, 4294901760
        %v1054 = vsub.f32 %v599, %v1053
        %v1055 = vand.u32 %v1054, 4294901760
        %v1056 = vsub.f32 %v1054, %v1055
        %v1057 = vand.u32 %v1056, 4294901760
        %1058 = vmatpush.xpose.msra.mxu0 %v1057
        %v1059 = vand.u32 %v597, 4294901760
        %v1060 = vsub.f32 %v597, %v1059
        %v1061 = vand.u32 %v1060, 4294901760
        %v1062 = vsub.f32 %v1060, %v1061
        %v1063 = vand.u32 %v1062, 4294901760
        %1064 = vmatpush.xpose.msra.mxu0 %v1063
        %v1065 = vand.u32 %v595, 4294901760
        %v1066 = vsub.f32 %v595, %v1065
        %v1067 = vand.u32 %v1066, 4294901760
        %v1068 = vsub.f32 %v1066, %v1067
        %v1069 = vand.u32 %v1068, 4294901760
        %1070 = vmatpush.xpose.msra.mxu0 %v1069
        %v1071 = vand.u32 %v593, 4294901760
        %v1072 = vsub.f32 %v593, %v1071
        %v1073 = vand.u32 %v1072, 4294901760
        %v1074 = vsub.f32 %v1072, %v1073
        %v1075 = vand.u32 %v1074, 4294901760
        %1076 = vmatpush.xpose.msra.mxu0 %v1075
        %v1077 = vand.u32 %v591, 4294901760
        %v1078 = vsub.f32 %v591, %v1077
        %v1079 = vand.u32 %v1078, 4294901760
        %v1080 = vsub.f32 %v1078, %v1079
        %v1081 = vand.u32 %v1080, 4294901760
        %1082 = vmatpush.xpose.msra.mxu0 %v1081
        %v1083 = vand.u32 %v589, 4294901760
        %v1084 = vsub.f32 %v589, %v1083
        %v1085 = vand.u32 %v1084, 4294901760
        %v1086 = vsub.f32 %v1084, %v1085
        %v1087 = vand.u32 %v1086, 4294901760
        %1088 = vmatpush.xpose.msra.mxu0 %v1087
        %v1089 = vand.u32 %v587, 4294901760
        %v1090 = vsub.f32 %v587, %v1089
        %v1091 = vand.u32 %v1090, 4294901760
        %v1092 = vsub.f32 %v1090, %v1091
        %v1093 = vand.u32 %v1092, 4294901760
        %1094 = vmatpush.xpose.msra.mxu0 %v1093
        %v1095 = vand.u32 %v585, 4294901760
        %v1096 = vsub.f32 %v585, %v1095
        %v1097 = vand.u32 %v1096, 4294901760
        %v1098 = vsub.f32 %v1096, %v1097
        %v1099 = vand.u32 %v1098, 4294901760
        %1100 = vmatpush.xpose.msra.mxu0 %v1099
        %v1101 = vand.u32 %v620, 4294901760
        %1102 = vmatmul.f32.gmra.mxu0 %v1101
        %v1103 = vpop.f32.mrf.mxu0
        %v1104 = vadd.f32 %v1003, %v1103
        %1105 = vdwg.mxu0
        %v1106 = vand.u32 %v615, 4294901760
        %v1107 = vsub.f32 %v615, %v1106
        %1108 = vmatpush.xpose.msra.mxu0 %v1107
        %v1109 = vand.u32 %v613, 4294901760
        %v1110 = vsub.f32 %v613, %v1109
        %1111 = vmatpush.xpose.msra.mxu0 %v1110
        %v1112 = vand.u32 %v611, 4294901760
        %v1113 = vsub.f32 %v611, %v1112
        %1114 = vmatpush.xpose.msra.mxu0 %v1113
        %v1115 = vand.u32 %v609, 4294901760
        %v1116 = vsub.f32 %v609, %v1115
        %1117 = vmatpush.xpose.msra.mxu0 %v1116
        %v1118 = vand.u32 %v607, 4294901760
        %v1119 = vsub.f32 %v607, %v1118
        %1120 = vmatpush.xpose.msra.mxu0 %v1119
        %v1121 = vand.u32 %v605, 4294901760
        %v1122 = vsub.f32 %v605, %v1121
        %1123 = vmatpush.xpose.msra.mxu0 %v1122
        %v1124 = vand.u32 %v603, 4294901760
        %v1125 = vsub.f32 %v603, %v1124
        %1126 = vmatpush.xpose.msra.mxu0 %v1125
        %v1127 = vand.u32 %v601, 4294901760
        %v1128 = vsub.f32 %v601, %v1127
        %1129 = vmatpush.xpose.msra.mxu0 %v1128
        %v1130 = vand.u32 %v599, 4294901760
        %v1131 = vsub.f32 %v599, %v1130
        %1132 = vmatpush.xpose.msra.mxu0 %v1131
        %v1133 = vand.u32 %v597, 4294901760
        %v1134 = vsub.f32 %v597, %v1133
        %1135 = vmatpush.xpose.msra.mxu0 %v1134
        %v1136 = vand.u32 %v595, 4294901760
        %v1137 = vsub.f32 %v595, %v1136
        %1138 = vmatpush.xpose.msra.mxu0 %v1137
        %v1139 = vand.u32 %v593, 4294901760
        %v1140 = vsub.f32 %v593, %v1139
        %1141 = vmatpush.xpose.msra.mxu0 %v1140
        %v1142 = vand.u32 %v591, 4294901760
        %v1143 = vsub.f32 %v591, %v1142
        %1144 = vmatpush.xpose.msra.mxu0 %v1143
        %v1145 = vand.u32 %v589, 4294901760
        %v1146 = vsub.f32 %v589, %v1145
        %1147 = vmatpush.xpose.msra.mxu0 %v1146
        %v1148 = vand.u32 %v587, 4294901760
        %v1149 = vsub.f32 %v587, %v1148
        %1150 = vmatpush.xpose.msra.mxu0 %v1149
        %v1151 = vand.u32 %v585, 4294901760
        %v1152 = vsub.f32 %v585, %v1151
        %1153 = vmatpush.xpose.msra.mxu0 %v1152
        %v1154 = vand.u32 %v620, 4294901760
        %v1155 = vsub.f32 %v620, %v1154
        %1156 = vmatmul.f32.gmra.mxu0 %v1155
        %v1157 = vpop.f32.mrf.mxu0
        %v1158 = vadd.f32 %v1104, %v1157
        %1159 = vdwg.mxu0
        %v1160 = vand.u32 %v615, 4294901760
        %1161 = vmatpush.xpose.msra.mxu0 %v1160
        %v1162 = vand.u32 %v613, 4294901760
        %1163 = vmatpush.xpose.msra.mxu0 %v1162
        %v1164 = vand.u32 %v611, 4294901760
        %1165 = vmatpush.xpose.msra.mxu0 %v1164
        %v1166 = vand.u32 %v609, 4294901760
        %1167 = vmatpush.xpose.msra.mxu0 %v1166
        %v1168 = vand.u32 %v607, 4294901760
        %1169 = vmatpush.xpose.msra.mxu0 %v1168
        %v1170 = vand.u32 %v605, 4294901760
        %1171 = vmatpush.xpose.msra.mxu0 %v1170
        %v1172 = vand.u32 %v603, 4294901760
        %1173 = vmatpush.xpose.msra.mxu0 %v1172
        %v1174 = vand.u32 %v601, 4294901760
        %1175 = vmatpush.xpose.msra.mxu0 %v1174
        %v1176 = vand.u32 %v599, 4294901760
        %1177 = vmatpush.xpose.msra.mxu0 %v1176
        %v1178 = vand.u32 %v597, 4294901760
        %1179 = vmatpush.xpose.msra.mxu0 %v1178
        %v1180 = vand.u32 %v595, 4294901760
        %1181 = vmatpush.xpose.msra.mxu0 %v1180
        %v1182 = vand.u32 %v593, 4294901760
        %1183 = vmatpush.xpose.msra.mxu0 %v1182
        %v1184 = vand.u32 %v591, 4294901760
        %1185 = vmatpush.xpose.msra.mxu0 %v1184
        %v1186 = vand.u32 %v589, 4294901760
        %1187 = vmatpush.xpose.msra.mxu0 %v1186
        %v1188 = vand.u32 %v587, 4294901760
        %1189 = vmatpush.xpose.msra.mxu0 %v1188
        %v1190 = vand.u32 %v585, 4294901760
        %1191 = vmatpush.xpose.msra.mxu0 %v1190
        %v1192 = vand.u32 %v620, 4294901760
        %v1193 = vsub.f32 %v620, %v1192
        %v1194 = vand.u32 %v1193, 4294901760
        %1195 = vmatmul.f32.gmra.mxu0 %v1194
        %v1196 = vpop.f32.mrf.mxu0
        %v1197 = vadd.f32 %v1158, %v1196
        %1198 = vdwg.mxu0
        %v1199 = vand.u32 %v615, 4294901760
        %v1200 = vsub.f32 %v615, %v1199
        %v1201 = vand.u32 %v1200, 4294901760
        %1202 = vmatpush.xpose.msra.mxu0 %v1201
        %v1203 = vand.u32 %v613, 4294901760
        %v1204 = vsub.f32 %v613, %v1203
        %v1205 = vand.u32 %v1204, 4294901760
        %1206 = vmatpush.xpose.msra.mxu0 %v1205
        %v1207 = vand.u32 %v611, 4294901760
        %v1208 = vsub.f32 %v611, %v1207
        %v1209 = vand.u32 %v1208, 4294901760
        %1210 = vmatpush.xpose.msra.mxu0 %v1209
        %v1211 = vand.u32 %v609, 4294901760
        %v1212 = vsub.f32 %v609, %v1211
        %v1213 = vand.u32 %v1212, 4294901760
        %1214 = vmatpush.xpose.msra.mxu0 %v1213
        %v1215 = vand.u32 %v607, 4294901760
        %v1216 = vsub.f32 %v607, %v1215
        %v1217 = vand.u32 %v1216, 4294901760
        %1218 = vmatpush.xpose.msra.mxu0 %v1217
        %v1219 = vand.u32 %v605, 4294901760
        %v1220 = vsub.f32 %v605, %v1219
        %v1221 = vand.u32 %v1220, 4294901760
        %1222 = vmatpush.xpose.msra.mxu0 %v1221
        %v1223 = vand.u32 %v603, 4294901760
        %v1224 = vsub.f32 %v603, %v1223
        %v1225 = vand.u32 %v1224, 4294901760
        %1226 = vmatpush.xpose.msra.mxu0 %v1225
        %v1227 = vand.u32 %v601, 4294901760
        %v1228 = vsub.f32 %v601, %v1227
        %v1229 = vand.u32 %v1228, 4294901760
        %1230 = vmatpush.xpose.msra.mxu0 %v1229
        %v1231 = vand.u32 %v599, 4294901760
        %v1232 = vsub.f32 %v599, %v1231
        %v1233 = vand.u32 %v1232, 4294901760
        %1234 = vmatpush.xpose.msra.mxu0 %v1233
        %v1235 = vand.u32 %v597, 4294901760
        %v1236 = vsub.f32 %v597, %v1235
        %v1237 = vand.u32 %v1236, 4294901760
        %1238 = vmatpush.xpose.msra.mxu0 %v1237
        %v1239 = vand.u32 %v595, 4294901760
        %v1240 = vsub.f32 %v595, %v1239
        %v1241 = vand.u32 %v1240, 4294901760
        %1242 = vmatpush.xpose.msra.mxu0 %v1241
        %v1243 = vand.u32 %v593, 4294901760
        %v1244 = vsub.f32 %v593, %v1243
        %v1245 = vand.u32 %v1244, 4294901760
        %1246 = vmatpush.xpose.msra.mxu0 %v1245
        %v1247 = vand.u32 %v591, 4294901760
        %v1248 = vsub.f32 %v591, %v1247
        %v1249 = vand.u32 %v1248, 4294901760
        %1250 = vmatpush.xpose.msra.mxu0 %v1249
        %v1251 = vand.u32 %v589, 4294901760
        %v1252 = vsub.f32 %v589, %v1251
        %v1253 = vand.u32 %v1252, 4294901760
        %1254 = vmatpush.xpose.msra.mxu0 %v1253
        %v1255 = vand.u32 %v587, 4294901760
        %v1256 = vsub.f32 %v587, %v1255
        %v1257 = vand.u32 %v1256, 4294901760
        %1258 = vmatpush.xpose.msra.mxu0 %v1257
        %v1259 = vand.u32 %v585, 4294901760
        %v1260 = vsub.f32 %v585, %v1259
        %v1261 = vand.u32 %v1260, 4294901760
        %1262 = vmatpush.xpose.msra.mxu0 %v1261
        %v1263 = vand.u32 %v620, 4294901760
        %1264 = vmatmul.f32.gmra.mxu0 %v1263
        %v1265 = vpop.f32.mrf.mxu0
        %v1266 = vadd.f32 %v1197, %v1265
        %1267 = vdwg.mxu0
        %v1268 = vand.u32 %v615, 4294901760
        %1269 = vmatpush.xpose.msra.mxu0 %v1268
        %v1270 = vand.u32 %v613, 4294901760
        %1271 = vmatpush.xpose.msra.mxu0 %v1270
        %v1272 = vand.u32 %v611, 4294901760
        %1273 = vmatpush.xpose.msra.mxu0 %v1272
        %v1274 = vand.u32 %v609, 4294901760
        %1275 = vmatpush.xpose.msra.mxu0 %v1274
        %v1276 = vand.u32 %v607, 4294901760
        %1277 = vmatpush.xpose.msra.mxu0 %v1276
        %v1278 = vand.u32 %v605, 4294901760
        %1279 = vmatpush.xpose.msra.mxu0 %v1278
        %v1280 = vand.u32 %v603, 4294901760
        %1281 = vmatpush.xpose.msra.mxu0 %v1280
        %v1282 = vand.u32 %v601, 4294901760
        %1283 = vmatpush.xpose.msra.mxu0 %v1282
        %v1284 = vand.u32 %v599, 4294901760
        %1285 = vmatpush.xpose.msra.mxu0 %v1284
        %v1286 = vand.u32 %v597, 4294901760
        %1287 = vmatpush.xpose.msra.mxu0 %v1286
        %v1288 = vand.u32 %v595, 4294901760
        %1289 = vmatpush.xpose.msra.mxu0 %v1288
        %v1290 = vand.u32 %v593, 4294901760
        %1291 = vmatpush.xpose.msra.mxu0 %v1290
        %v1292 = vand.u32 %v591, 4294901760
        %1293 = vmatpush.xpose.msra.mxu0 %v1292
        %v1294 = vand.u32 %v589, 4294901760
        %1295 = vmatpush.xpose.msra.mxu0 %v1294
        %v1296 = vand.u32 %v587, 4294901760
        %1297 = vmatpush.xpose.msra.mxu0 %v1296
        %v1298 = vand.u32 %v585, 4294901760
        %1299 = vmatpush.xpose.msra.mxu0 %v1298
        %v1300 = vand.u32 %v620, 4294901760
        %1301 = vmatmul.f32.gmra.mxu0 %v1300
        %v1302 = vpop.f32.mrf.mxu0
        %v1303 = vadd.f32 %v1266, %v1302
        %1304 = vdwg.mxu0
        %1305 = vst [vmem:[%s272] sm:$0xf] %v1303
        %v1306 = vld [vmem:[#allocation7] sm:$0xf]
        %1308 = vst [vmem:[#allocation1] ss:$4 sm:$0xff] %v1306
        %v1309 = vld.sshfl [vmem:[#allocation1] sm:$0xff pattern:$0x73625140]
        %v1310 = vld.sshfl [vmem:[#allocation1 + $0x8] sm:$0xff pattern:$0x73625140]
        %v1313 = vand.u32 %v614, 4294901760
        %1314 = vmatpush.xpose.msra.mxu0 %v1313
        %v1315 = vand.u32 %v612, 4294901760
        %1316 = vmatpush.xpose.msra.mxu0 %v1315
        %v1317 = vand.u32 %v610, 4294901760
        %1318 = vmatpush.xpose.msra.mxu0 %v1317
        %v1319 = vand.u32 %v608, 4294901760
        %1320 = vmatpush.xpose.msra.mxu0 %v1319
        %v1321 = vand.u32 %v606, 4294901760
        %1322 = vmatpush.xpose.msra.mxu0 %v1321
        %v1323 = vand.u32 %v604, 4294901760
        %1324 = vmatpush.xpose.msra.mxu0 %v1323
        %v1325 = vand.u32 %v602, 4294901760
        %1326 = vmatpush.xpose.msra.mxu0 %v1325
        %v1327 = vand.u32 %v600, 4294901760
        %1328 = vmatpush.xpose.msra.mxu0 %v1327
        %v1329 = vand.u32 %v598, 4294901760
        %1330 = vmatpush.xpose.msra.mxu0 %v1329
        %v1331 = vand.u32 %v596, 4294901760
        %1332 = vmatpush.xpose.msra.mxu0 %v1331
        %v1333 = vand.u32 %v594, 4294901760
        %1334 = vmatpush.xpose.msra.mxu0 %v1333
        %v1335 = vand.u32 %v592, 4294901760
        %1336 = vmatpush.xpose.msra.mxu0 %v1335
        %v1337 = vand.u32 %v590, 4294901760
        %1338 = vmatpush.xpose.msra.mxu0 %v1337
        %v1339 = vand.u32 %v588, 4294901760
        %1340 = vmatpush.xpose.msra.mxu0 %v1339
        %v1341 = vand.u32 %v586, 4294901760
        %1342 = vmatpush.xpose.msra.mxu0 %v1341
        %v1343 = vand.u32 %v584, 4294901760
        %1344 = vmatpush.xpose.msra.mxu0 %v1343
        %v1345 = vand.u32 %v1309, 4294901760
        %v1346 = vsub.f32 %v1309, %v1345
        %v1347 = vand.u32 %v1346, 4294901760
        %v1348 = vsub.f32 %v1346, %v1347
        %v1349 = vand.u32 %v1348, 4294901760
        %1350 = vmatmul.f32.gmra.mxu0 %v1349
        %v1351 = vpop.f32.mrf.mxu0
        %v1352 = vadd.f32 0.0, %v1351
        %1353 = vdwg.mxu0
        %v1354 = vand.u32 %v614, 4294901760
        %v1355 = vsub.f32 %v614, %v1354
        %v1356 = vand.u32 %v1355, 4294901760
        %v1357 = vsub.f32 %v1355, %v1356
        %v1358 = vand.u32 %v1357, 4294901760
        %1359 = vmatpush.xpose.msra.mxu0 %v1358
        %v1360 = vand.u32 %v612, 4294901760
        %v1361 = vsub.f32 %v612, %v1360
        %v1362 = vand.u32 %v1361, 4294901760
        %v1363 = vsub.f32 %v1361, %v1362
        %v1364 = vand.u32 %v1363, 4294901760
        %1365 = vmatpush.xpose.msra.mxu0 %v1364
        %v1366 = vand.u32 %v610, 4294901760
        %v1367 = vsub.f32 %v610, %v1366
        %v1368 = vand.u32 %v1367, 4294901760
        %v1369 = vsub.f32 %v1367, %v1368
        %v1370 = vand.u32 %v1369, 4294901760
        %1371 = vmatpush.xpose.msra.mxu0 %v1370
        %v1372 = vand.u32 %v608, 4294901760
        %v1373 = vsub.f32 %v608, %v1372
        %v1374 = vand.u32 %v1373, 4294901760
        %v1375 = vsub.f32 %v1373, %v1374
        %v1376 = vand.u32 %v1375, 4294901760
        %1377 = vmatpush.xpose.msra.mxu0 %v1376
        %v1378 = vand.u32 %v606, 4294901760
        %v1379 = vsub.f32 %v606, %v1378
        %v1380 = vand.u32 %v1379, 4294901760
        %v1381 = vsub.f32 %v1379, %v1380
        %v1382 = vand.u32 %v1381, 4294901760
        %1383 = vmatpush.xpose.msra.mxu0 %v1382
        %v1384 = vand.u32 %v604, 4294901760
        %v1385 = vsub.f32 %v604, %v1384
        %v1386 = vand.u32 %v1385, 4294901760
        %v1387 = vsub.f32 %v1385, %v1386
        %v1388 = vand.u32 %v1387, 4294901760
        %1389 = vmatpush.xpose.msra.mxu0 %v1388
        %v1390 = vand.u32 %v602, 4294901760
        %v1391 = vsub.f32 %v602, %v1390
        %v1392 = vand.u32 %v1391, 4294901760
        %v1393 = vsub.f32 %v1391, %v1392
        %v1394 = vand.u32 %v1393, 4294901760
        %1395 = vmatpush.xpose.msra.mxu0 %v1394
        %v1396 = vand.u32 %v600, 4294901760
        %v1397 = vsub.f32 %v600, %v1396
        %v1398 = vand.u32 %v1397, 4294901760
        %v1399 = vsub.f32 %v1397, %v1398
        %v1400 = vand.u32 %v1399, 4294901760
        %1401 = vmatpush.xpose.msra.mxu0 %v1400
        %v1402 = vand.u32 %v598, 4294901760
        %v1403 = vsub.f32 %v598, %v1402
        %v1404 = vand.u32 %v1403, 4294901760
        %v1405 = vsub.f32 %v1403, %v1404
        %v1406 = vand.u32 %v1405, 4294901760
        %1407 = vmatpush.xpose.msra.mxu0 %v1406
        %v1408 = vand.u32 %v596, 4294901760
        %v1409 = vsub.f32 %v596, %v1408
        %v1410 = vand.u32 %v1409, 4294901760
        %v1411 = vsub.f32 %v1409, %v1410
        %v1412 = vand.u32 %v1411, 4294901760
        %1413 = vmatpush.xpose.msra.mxu0 %v1412
        %v1414 = vand.u32 %v594, 4294901760
        %v1415 = vsub.f32 %v594, %v1414
        %v1416 = vand.u32 %v1415, 4294901760
        %v1417 = vsub.f32 %v1415, %v1416
        %v1418 = vand.u32 %v1417, 4294901760
        %1419 = vmatpush.xpose.msra.mxu0 %v1418
        %v1420 = vand.u32 %v592, 4294901760
        %v1421 = vsub.f32 %v592, %v1420
        %v1422 = vand.u32 %v1421, 4294901760
        %v1423 = vsub.f32 %v1421, %v1422
        %v1424 = vand.u32 %v1423, 4294901760
        %1425 = vmatpush.xpose.msra.mxu0 %v1424
        %v1426 = vand.u32 %v590, 4294901760
        %v1427 = vsub.f32 %v590, %v1426
        %v1428 = vand.u32 %v1427, 4294901760
        %v1429 = vsub.f32 %v1427, %v1428
        %v1430 = vand.u32 %v1429, 4294901760
        %1431 = vmatpush.xpose.msra.mxu0 %v1430
        %v1432 = vand.u32 %v588, 4294901760
        %v1433 = vsub.f32 %v588, %v1432
        %v1434 = vand.u32 %v1433, 4294901760
        %v1435 = vsub.f32 %v1433, %v1434
        %v1436 = vand.u32 %v1435, 4294901760
        %1437 = vmatpush.xpose.msra.mxu0 %v1436
        %v1438 = vand.u32 %v586, 4294901760
        %v1439 = vsub.f32 %v586, %v1438
        %v1440 = vand.u32 %v1439, 4294901760
        %v1441 = vsub.f32 %v1439, %v1440
        %v1442 = vand.u32 %v1441, 4294901760
        %1443 = vmatpush.xpose.msra.mxu0 %v1442
        %v1444 = vand.u32 %v584, 4294901760
        %v1445 = vsub.f32 %v584, %v1444
        %v1446 = vand.u32 %v1445, 4294901760
        %v1447 = vsub.f32 %v1445, %v1446
        %v1448 = vand.u32 %v1447, 4294901760
        %1449 = vmatpush.xpose.msra.mxu0 %v1448
        %v1450 = vand.u32 %v1309, 4294901760
        %1451 = vmatmul.f32.gmra.mxu0 %v1450
        %v1452 = vpop.f32.mrf.mxu0
        %v1453 = vadd.f32 %v1352, %v1452
        %1454 = vdwg.mxu0
        %v1455 = vand.u32 %v614, 4294901760
        %v1456 = vsub.f32 %v614, %v1455
        %1457 = vmatpush.xpose.msra.mxu0 %v1456
        %v1458 = vand.u32 %v612, 4294901760
        %v1459 = vsub.f32 %v612, %v1458
        %1460 = vmatpush.xpose.msra.mxu0 %v1459
        %v1461 = vand.u32 %v610, 4294901760
        %v1462 = vsub.f32 %v610, %v1461
        %1463 = vmatpush.xpose.msra.mxu0 %v1462
        %v1464 = vand.u32 %v608, 4294901760
        %v1465 = vsub.f32 %v608, %v1464
        %1466 = vmatpush.xpose.msra.mxu0 %v1465
        %v1467 = vand.u32 %v606, 4294901760
        %v1468 = vsub.f32 %v606, %v1467
        %1469 = vmatpush.xpose.msra.mxu0 %v1468
        %v1470 = vand.u32 %v604, 4294901760
        %v1471 = vsub.f32 %v604, %v1470
        %1472 = vmatpush.xpose.msra.mxu0 %v1471
        %v1473 = vand.u32 %v602, 4294901760
        %v1474 = vsub.f32 %v602, %v1473
        %1475 = vmatpush.xpose.msra.mxu0 %v1474
        %v1476 = vand.u32 %v600, 4294901760
        %v1477 = vsub.f32 %v600, %v1476
        %1478 = vmatpush.xpose.msra.mxu0 %v1477
        %v1479 = vand.u32 %v598, 4294901760
        %v1480 = vsub.f32 %v598, %v1479
        %1481 = vmatpush.xpose.msra.mxu0 %v1480
        %v1482 = vand.u32 %v596, 4294901760
        %v1483 = vsub.f32 %v596, %v1482
        %1484 = vmatpush.xpose.msra.mxu0 %v1483
        %v1485 = vand.u32 %v594, 4294901760
        %v1486 = vsub.f32 %v594, %v1485
        %1487 = vmatpush.xpose.msra.mxu0 %v1486
        %v1488 = vand.u32 %v592, 4294901760
        %v1489 = vsub.f32 %v592, %v1488
        %1490 = vmatpush.xpose.msra.mxu0 %v1489
        %v1491 = vand.u32 %v590, 4294901760
        %v1492 = vsub.f32 %v590, %v1491
        %1493 = vmatpush.xpose.msra.mxu0 %v1492
        %v1494 = vand.u32 %v588, 4294901760
        %v1495 = vsub.f32 %v588, %v1494
        %1496 = vmatpush.xpose.msra.mxu0 %v1495
        %v1497 = vand.u32 %v586, 4294901760
        %v1498 = vsub.f32 %v586, %v1497
        %1499 = vmatpush.xpose.msra.mxu0 %v1498
        %v1500 = vand.u32 %v584, 4294901760
        %v1501 = vsub.f32 %v584, %v1500
        %1502 = vmatpush.xpose.msra.mxu0 %v1501
        %v1503 = vand.u32 %v1309, 4294901760
        %v1504 = vsub.f32 %v1309, %v1503
        %1505 = vmatmul.f32.gmra.mxu0 %v1504
        %v1506 = vpop.f32.mrf.mxu0
        %v1507 = vadd.f32 %v1453, %v1506
        %1508 = vdwg.mxu0
        %v1509 = vand.u32 %v614, 4294901760
        %1510 = vmatpush.xpose.msra.mxu0 %v1509
        %v1511 = vand.u32 %v612, 4294901760
        %1512 = vmatpush.xpose.msra.mxu0 %v1511
        %v1513 = vand.u32 %v610, 4294901760
        %1514 = vmatpush.xpose.msra.mxu0 %v1513
        %v1515 = vand.u32 %v608, 4294901760
        %1516 = vmatpush.xpose.msra.mxu0 %v1515
        %v1517 = vand.u32 %v606, 4294901760
        %1518 = vmatpush.xpose.msra.mxu0 %v1517
        %v1519 = vand.u32 %v604, 4294901760
        %1520 = vmatpush.xpose.msra.mxu0 %v1519
        %v1521 = vand.u32 %v602, 4294901760
        %1522 = vmatpush.xpose.msra.mxu0 %v1521
        %v1523 = vand.u32 %v600, 4294901760
        %1524 = vmatpush.xpose.msra.mxu0 %v1523
        %v1525 = vand.u32 %v598, 4294901760
        %1526 = vmatpush.xpose.msra.mxu0 %v1525
        %v1527 = vand.u32 %v596, 4294901760
        %1528 = vmatpush.xpose.msra.mxu0 %v1527
        %v1529 = vand.u32 %v594, 4294901760
        %1530 = vmatpush.xpose.msra.mxu0 %v1529
        %v1531 = vand.u32 %v592, 4294901760
        %1532 = vmatpush.xpose.msra.mxu0 %v1531
        %v1533 = vand.u32 %v590, 4294901760
        %1534 = vmatpush.xpose.msra.mxu0 %v1533
        %v1535 = vand.u32 %v588, 4294901760
        %1536 = vmatpush.xpose.msra.mxu0 %v1535
        %v1537 = vand.u32 %v586, 4294901760
        %1538 = vmatpush.xpose.msra.mxu0 %v1537
        %v1539 = vand.u32 %v584, 4294901760
        %1540 = vmatpush.xpose.msra.mxu0 %v1539
        %v1541 = vand.u32 %v1309, 4294901760
        %v1542 = vsub.f32 %v1309, %v1541
        %v1543 = vand.u32 %v1542, 4294901760
        %1544 = vmatmul.f32.gmra.mxu0 %v1543
        %v1545 = vpop.f32.mrf.mxu0
        %v1546 = vadd.f32 %v1507, %v1545
        %1547 = vdwg.mxu0
        %v1548 = vand.u32 %v614, 4294901760
        %v1549 = vsub.f32 %v614, %v1548
        %v1550 = vand.u32 %v1549, 4294901760
        %1551 = vmatpush.xpose.msra.mxu0 %v1550
        %v1552 = vand.u32 %v612, 4294901760
        %v1553 = vsub.f32 %v612, %v1552
        %v1554 = vand.u32 %v1553, 4294901760
        %1555 = vmatpush.xpose.msra.mxu0 %v1554
        %v1556 = vand.u32 %v610, 4294901760
        %v1557 = vsub.f32 %v610, %v1556
        %v1558 = vand.u32 %v1557, 4294901760
        %1559 = vmatpush.xpose.msra.mxu0 %v1558
        %v1560 = vand.u32 %v608, 4294901760
        %v1561 = vsub.f32 %v608, %v1560
        %v1562 = vand.u32 %v1561, 4294901760
        %1563 = vmatpush.xpose.msra.mxu0 %v1562
        %v1564 = vand.u32 %v606, 4294901760
        %v1565 = vsub.f32 %v606, %v1564
        %v1566 = vand.u32 %v1565, 4294901760
        %1567 = vmatpush.xpose.msra.mxu0 %v1566
        %v1568 = vand.u32 %v604, 4294901760
        %v1569 = vsub.f32 %v604, %v1568
        %v1570 = vand.u32 %v1569, 4294901760
        %1571 = vmatpush.xpose.msra.mxu0 %v1570
        %v1572 = vand.u32 %v602, 4294901760
        %v1573 = vsub.f32 %v602, %v1572
        %v1574 = vand.u32 %v1573, 4294901760
        %1575 = vmatpush.xpose.msra.mxu0 %v1574
        %v1576 = vand.u32 %v600, 4294901760
        %v1577 = vsub.f32 %v600, %v1576
        %v1578 = vand.u32 %v1577, 4294901760
        %1579 = vmatpush.xpose.msra.mxu0 %v1578
        %v1580 = vand.u32 %v598, 4294901760
        %v1581 = vsub.f32 %v598, %v1580
        %v1582 = vand.u32 %v1581, 4294901760
        %1583 = vmatpush.xpose.msra.mxu0 %v1582
        %v1584 = vand.u32 %v596, 4294901760
        %v1585 = vsub.f32 %v596, %v1584
        %v1586 = vand.u32 %v1585, 4294901760
        %1587 = vmatpush.xpose.msra.mxu0 %v1586
        %v1588 = vand.u32 %v594, 4294901760
        %v1589 = vsub.f32 %v594, %v1588
        %v1590 = vand.u32 %v1589, 4294901760
        %1591 = vmatpush.xpose.msra.mxu0 %v1590
        %v1592 = vand.u32 %v592, 4294901760
        %v1593 = vsub.f32 %v592, %v1592
        %v1594 = vand.u32 %v1593, 4294901760
        %1595 = vmatpush.xpose.msra.mxu0 %v1594
        %v1596 = vand.u32 %v590, 4294901760
        %v1597 = vsub.f32 %v590, %v1596
        %v1598 = vand.u32 %v1597, 4294901760
        %1599 = vmatpush.xpose.msra.mxu0 %v1598
        %v1600 = vand.u32 %v588, 4294901760
        %v1601 = vsub.f32 %v588, %v1600
        %v1602 = vand.u32 %v1601, 4294901760
        %1603 = vmatpush.xpose.msra.mxu0 %v1602
        %v1604 = vand.u32 %v586, 4294901760
        %v1605 = vsub.f32 %v586, %v1604
        %v1606 = vand.u32 %v1605, 4294901760
        %1607 = vmatpush.xpose.msra.mxu0 %v1606
        %v1608 = vand.u32 %v584, 4294901760
        %v1609 = vsub.f32 %v584, %v1608
        %v1610 = vand.u32 %v1609, 4294901760
        %1611 = vmatpush.xpose.msra.mxu0 %v1610
        %v1612 = vand.u32 %v1309, 4294901760
        %1613 = vmatmul.f32.gmra.mxu0 %v1612
        %v1614 = vpop.f32.mrf.mxu0
        %v1615 = vadd.f32 %v1546, %v1614
        %1616 = vdwg.mxu0
        %v1617 = vand.u32 %v614, 4294901760
        %1618 = vmatpush.xpose.msra.mxu0 %v1617
        %v1619 = vand.u32 %v612, 4294901760
        %1620 = vmatpush.xpose.msra.mxu0 %v1619
        %v1621 = vand.u32 %v610, 4294901760
        %1622 = vmatpush.xpose.msra.mxu0 %v1621
        %v1623 = vand.u32 %v608, 4294901760
        %1624 = vmatpush.xpose.msra.mxu0 %v1623
        %v1625 = vand.u32 %v606, 4294901760
        %1626 = vmatpush.xpose.msra.mxu0 %v1625
        %v1627 = vand.u32 %v604, 4294901760
        %1628 = vmatpush.xpose.msra.mxu0 %v1627
        %v1629 = vand.u32 %v602, 4294901760
        %1630 = vmatpush.xpose.msra.mxu0 %v1629
        %v1631 = vand.u32 %v600, 4294901760
        %1632 = vmatpush.xpose.msra.mxu0 %v1631
        %v1633 = vand.u32 %v598, 4294901760
        %1634 = vmatpush.xpose.msra.mxu0 %v1633
        %v1635 = vand.u32 %v596, 4294901760
        %1636 = vmatpush.xpose.msra.mxu0 %v1635
        %v1637 = vand.u32 %v594, 4294901760
        %1638 = vmatpush.xpose.msra.mxu0 %v1637
        %v1639 = vand.u32 %v592, 4294901760
        %1640 = vmatpush.xpose.msra.mxu0 %v1639
        %v1641 = vand.u32 %v590, 4294901760
        %1642 = vmatpush.xpose.msra.mxu0 %v1641
        %v1643 = vand.u32 %v588, 4294901760
        %1644 = vmatpush.xpose.msra.mxu0 %v1643
        %v1645 = vand.u32 %v586, 4294901760
        %1646 = vmatpush.xpose.msra.mxu0 %v1645
        %v1647 = vand.u32 %v584, 4294901760
        %1648 = vmatpush.xpose.msra.mxu0 %v1647
        %v1649 = vand.u32 %v1309, 4294901760
        %1650 = vmatmul.f32.gmra.mxu0 %v1649
        %v1651 = vpop.f32.mrf.mxu0
        %v1652 = vadd.f32 %v1615, %v1651
        %1653 = vdwg.mxu0
        %v1654 = vand.u32 %v615, 4294901760
        %1655 = vmatpush.xpose.msra.mxu0 %v1654
        %v1656 = vand.u32 %v613, 4294901760
        %1657 = vmatpush.xpose.msra.mxu0 %v1656
        %v1658 = vand.u32 %v611, 4294901760
        %1659 = vmatpush.xpose.msra.mxu0 %v1658
        %v1660 = vand.u32 %v609, 4294901760
        %1661 = vmatpush.xpose.msra.mxu0 %v1660
        %v1662 = vand.u32 %v607, 4294901760
        %1663 = vmatpush.xpose.msra.mxu0 %v1662
        %v1664 = vand.u32 %v605, 4294901760
        %1665 = vmatpush.xpose.msra.mxu0 %v1664
        %v1666 = vand.u32 %v603, 4294901760
        %1667 = vmatpush.xpose.msra.mxu0 %v1666
        %v1668 = vand.u32 %v601, 4294901760
        %1669 = vmatpush.xpose.msra.mxu0 %v1668
        %v1670 = vand.u32 %v599, 4294901760
        %1671 = vmatpush.xpose.msra.mxu0 %v1670
        %v1672 = vand.u32 %v597, 4294901760
        %1673 = vmatpush.xpose.msra.mxu0 %v1672
        %v1674 = vand.u32 %v595, 4294901760
        %1675 = vmatpush.xpose.msra.mxu0 %v1674
        %v1676 = vand.u32 %v593, 4294901760
        %1677 = vmatpush.xpose.msra.mxu0 %v1676
        %v1678 = vand.u32 %v591, 4294901760
        %1679 = vmatpush.xpose.msra.mxu0 %v1678
        %v1680 = vand.u32 %v589, 4294901760
        %1681 = vmatpush.xpose.msra.mxu0 %v1680
        %v1682 = vand.u32 %v587, 4294901760
        %1683 = vmatpush.xpose.msra.mxu0 %v1682
        %v1684 = vand.u32 %v585, 4294901760
        %1685 = vmatpush.xpose.msra.mxu0 %v1684
        %v1686 = vand.u32 %v1310, 4294901760
        %v1687 = vsub.f32 %v1310, %v1686
        %v1688 = vand.u32 %v1687, 4294901760
        %v1689 = vsub.f32 %v1687, %v1688
        %v1690 = vand.u32 %v1689, 4294901760
        %1691 = vmatmul.f32.gmra.mxu0 %v1690
        %v1692 = vpop.f32.mrf.mxu0
        %v1693 = vadd.f32 %v1652, %v1692
        %1694 = vdwg.mxu0
        %v1695 = vand.u32 %v615, 4294901760
        %v1696 = vsub.f32 %v615, %v1695
        %v1697 = vand.u32 %v1696, 4294901760
        %v1698 = vsub.f32 %v1696, %v1697
        %v1699 = vand.u32 %v1698, 4294901760
        %1700 = vmatpush.xpose.msra.mxu0 %v1699
        %v1701 = vand.u32 %v613, 4294901760
        %v1702 = vsub.f32 %v613, %v1701
        %v1703 = vand.u32 %v1702, 4294901760
        %v1704 = vsub.f32 %v1702, %v1703
        %v1705 = vand.u32 %v1704, 4294901760
        %1706 = vmatpush.xpose.msra.mxu0 %v1705
        %v1707 = vand.u32 %v611, 4294901760
        %v1708 = vsub.f32 %v611, %v1707
        %v1709 = vand.u32 %v1708, 4294901760
        %v1710 = vsub.f32 %v1708, %v1709
        %v1711 = vand.u32 %v1710, 4294901760
        %1712 = vmatpush.xpose.msra.mxu0 %v1711
        %v1713 = vand.u32 %v609, 4294901760
        %v1714 = vsub.f32 %v609, %v1713
        %v1715 = vand.u32 %v1714, 4294901760
        %v1716 = vsub.f32 %v1714, %v1715
        %v1717 = vand.u32 %v1716, 4294901760
        %1718 = vmatpush.xpose.msra.mxu0 %v1717
        %v1719 = vand.u32 %v607, 4294901760
        %v1720 = vsub.f32 %v607, %v1719
        %v1721 = vand.u32 %v1720, 4294901760
        %v1722 = vsub.f32 %v1720, %v1721
        %v1723 = vand.u32 %v1722, 4294901760
        %1724 = vmatpush.xpose.msra.mxu0 %v1723
        %v1725 = vand.u32 %v605, 4294901760
        %v1726 = vsub.f32 %v605, %v1725
        %v1727 = vand.u32 %v1726, 4294901760
        %v1728 = vsub.f32 %v1726, %v1727
        %v1729 = vand.u32 %v1728, 4294901760
        %1730 = vmatpush.xpose.msra.mxu0 %v1729
        %v1731 = vand.u32 %v603, 4294901760
        %v1732 = vsub.f32 %v603, %v1731
        %v1733 = vand.u32 %v1732, 4294901760
        %v1734 = vsub.f32 %v1732, %v1733
        %v1735 = vand.u32 %v1734, 4294901760
        %1736 = vmatpush.xpose.msra.mxu0 %v1735
        %v1737 = vand.u32 %v601, 4294901760
        %v1738 = vsub.f32 %v601, %v1737
        %v1739 = vand.u32 %v1738, 4294901760
        %v1740 = vsub.f32 %v1738, %v1739
        %v1741 = vand.u32 %v1740, 4294901760
        %1742 = vmatpush.xpose.msra.mxu0 %v1741
        %v1743 = vand.u32 %v599, 4294901760
        %v1744 = vsub.f32 %v599, %v1743
        %v1745 = vand.u32 %v1744, 4294901760
        %v1746 = vsub.f32 %v1744, %v1745
        %v1747 = vand.u32 %v1746, 4294901760
        %1748 = vmatpush.xpose.msra.mxu0 %v1747
        %v1749 = vand.u32 %v597, 4294901760
        %v1750 = vsub.f32 %v597, %v1749
        %v1751 = vand.u32 %v1750, 4294901760
        %v1752 = vsub.f32 %v1750, %v1751
        %v1753 = vand.u32 %v1752, 4294901760
        %1754 = vmatpush.xpose.msra.mxu0 %v1753
        %v1755 = vand.u32 %v595, 4294901760
        %v1756 = vsub.f32 %v595, %v1755
        %v1757 = vand.u32 %v1756, 4294901760
        %v1758 = vsub.f32 %v1756, %v1757
        %v1759 = vand.u32 %v1758, 4294901760
        %1760 = vmatpush.xpose.msra.mxu0 %v1759
        %v1761 = vand.u32 %v593, 4294901760
        %v1762 = vsub.f32 %v593, %v1761
        %v1763 = vand.u32 %v1762, 4294901760
        %v1764 = vsub.f32 %v1762, %v1763
        %v1765 = vand.u32 %v1764, 4294901760
        %1766 = vmatpush.xpose.msra.mxu0 %v1765
        %v1767 = vand.u32 %v591, 4294901760
        %v1768 = vsub.f32 %v591, %v1767
        %v1769 = vand.u32 %v1768, 4294901760
        %v1770 = vsub.f32 %v1768, %v1769
        %v1771 = vand.u32 %v1770, 4294901760
        %1772 = vmatpush.xpose.msra.mxu0 %v1771
        %v1773 = vand.u32 %v589, 4294901760
        %v1774 = vsub.f32 %v589, %v1773
        %v1775 = vand.u32 %v1774, 4294901760
        %v1776 = vsub.f32 %v1774, %v1775
        %v1777 = vand.u32 %v1776, 4294901760
        %1778 = vmatpush.xpose.msra.mxu0 %v1777
        %v1779 = vand.u32 %v587, 4294901760
        %v1780 = vsub.f32 %v587, %v1779
        %v1781 = vand.u32 %v1780, 4294901760
        %v1782 = vsub.f32 %v1780, %v1781
        %v1783 = vand.u32 %v1782, 4294901760
        %1784 = vmatpush.xpose.msra.mxu0 %v1783
        %v1785 = vand.u32 %v585, 4294901760
        %v1786 = vsub.f32 %v585, %v1785
        %v1787 = vand.u32 %v1786, 4294901760
        %v1788 = vsub.f32 %v1786, %v1787
        %v1789 = vand.u32 %v1788, 4294901760
        %1790 = vmatpush.xpose.msra.mxu0 %v1789
        %v1791 = vand.u32 %v1310, 4294901760
        %1792 = vmatmul.f32.gmra.mxu0 %v1791
        %v1793 = vpop.f32.mrf.mxu0
        %v1794 = vadd.f32 %v1693, %v1793
        %1795 = vdwg.mxu0
        %v1796 = vand.u32 %v615, 4294901760
        %v1797 = vsub.f32 %v615, %v1796
        %1798 = vmatpush.xpose.msra.mxu0 %v1797
        %v1799 = vand.u32 %v613, 4294901760
        %v1800 = vsub.f32 %v613, %v1799
        %1801 = vmatpush.xpose.msra.mxu0 %v1800
        %v1802 = vand.u32 %v611, 4294901760
        %v1803 = vsub.f32 %v611, %v1802
        %1804 = vmatpush.xpose.msra.mxu0 %v1803
        %v1805 = vand.u32 %v609, 4294901760
        %v1806 = vsub.f32 %v609, %v1805
        %1807 = vmatpush.xpose.msra.mxu0 %v1806
        %v1808 = vand.u32 %v607, 4294901760
        %v1809 = vsub.f32 %v607, %v1808
        %1810 = vmatpush.xpose.msra.mxu0 %v1809
        %v1811 = vand.u32 %v605, 4294901760
        %v1812 = vsub.f32 %v605, %v1811
        %1813 = vmatpush.xpose.msra.mxu0 %v1812
        %v1814 = vand.u32 %v603, 4294901760
        %v1815 = vsub.f32 %v603, %v1814
        %1816 = vmatpush.xpose.msra.mxu0 %v1815
        %v1817 = vand.u32 %v601, 4294901760
        %v1818 = vsub.f32 %v601, %v1817
        %1819 = vmatpush.xpose.msra.mxu0 %v1818
        %v1820 = vand.u32 %v599, 4294901760
        %v1821 = vsub.f32 %v599, %v1820
        %1822 = vmatpush.xpose.msra.mxu0 %v1821
        %v1823 = vand.u32 %v597, 4294901760
        %v1824 = vsub.f32 %v597, %v1823
        %1825 = vmatpush.xpose.msra.mxu0 %v1824
        %v1826 = vand.u32 %v595, 4294901760
        %v1827 = vsub.f32 %v595, %v1826
        %1828 = vmatpush.xpose.msra.mxu0 %v1827
        %v1829 = vand.u32 %v593, 4294901760
        %v1830 = vsub.f32 %v593, %v1829
        %1831 = vmatpush.xpose.msra.mxu0 %v1830
        %v1832 = vand.u32 %v591, 4294901760
        %v1833 = vsub.f32 %v591, %v1832
        %1834 = vmatpush.xpose.msra.mxu0 %v1833
        %v1835 = vand.u32 %v589, 4294901760
        %v1836 = vsub.f32 %v589, %v1835
        %1837 = vmatpush.xpose.msra.mxu0 %v1836
        %v1838 = vand.u32 %v587, 4294901760
        %v1839 = vsub.f32 %v587, %v1838
        %1840 = vmatpush.xpose.msra.mxu0 %v1839
        %v1841 = vand.u32 %v585, 4294901760
        %v1842 = vsub.f32 %v585, %v1841
        %1843 = vmatpush.xpose.msra.mxu0 %v1842
        %v1844 = vand.u32 %v1310, 4294901760
        %v1845 = vsub.f32 %v1310, %v1844
        %1846 = vmatmul.f32.gmra.mxu0 %v1845
        %v1847 = vpop.f32.mrf.mxu0
        %v1848 = vadd.f32 %v1794, %v1847
        %1849 = vdwg.mxu0
        %v1850 = vand.u32 %v615, 4294901760
        %1851 = vmatpush.xpose.msra.mxu0 %v1850
        %v1852 = vand.u32 %v613, 4294901760
        %1853 = vmatpush.xpose.msra.mxu0 %v1852
        %v1854 = vand.u32 %v611, 4294901760
        %1855 = vmatpush.xpose.msra.mxu0 %v1854
        %v1856 = vand.u32 %v609, 4294901760
        %1857 = vmatpush.xpose.msra.mxu0 %v1856
        %v1858 = vand.u32 %v607, 4294901760
        %1859 = vmatpush.xpose.msra.mxu0 %v1858
        %v1860 = vand.u32 %v605, 4294901760
        %1861 = vmatpush.xpose.msra.mxu0 %v1860
        %v1862 = vand.u32 %v603, 4294901760
        %1863 = vmatpush.xpose.msra.mxu0 %v1862
        %v1864 = vand.u32 %v601, 4294901760
        %1865 = vmatpush.xpose.msra.mxu0 %v1864
        %v1866 = vand.u32 %v599, 4294901760
        %1867 = vmatpush.xpose.msra.mxu0 %v1866
        %v1868 = vand.u32 %v597, 4294901760
        %1869 = vmatpush.xpose.msra.mxu0 %v1868
        %v1870 = vand.u32 %v595, 4294901760
        %1871 = vmatpush.xpose.msra.mxu0 %v1870
        %v1872 = vand.u32 %v593, 4294901760
        %1873 = vmatpush.xpose.msra.mxu0 %v1872
        %v1874 = vand.u32 %v591, 4294901760
        %1875 = vmatpush.xpose.msra.mxu0 %v1874
        %v1876 = vand.u32 %v589, 4294901760
        %1877 = vmatpush.xpose.msra.mxu0 %v1876
        %v1878 = vand.u32 %v587, 4294901760
        %1879 = vmatpush.xpose.msra.mxu0 %v1878
        %v1880 = vand.u32 %v585, 4294901760
        %1881 = vmatpush.xpose.msra.mxu0 %v1880
        %v1882 = vand.u32 %v1310, 4294901760
        %v1883 = vsub.f32 %v1310, %v1882
        %v1884 = vand.u32 %v1883, 4294901760
        %1885 = vmatmul.f32.gmra.mxu0 %v1884
        %v1886 = vpop.f32.mrf.mxu0
        %v1887 = vadd.f32 %v1848, %v1886
        %1888 = vdwg.mxu0
        %v1889 = vand.u32 %v615, 4294901760
        %v1890 = vsub.f32 %v615, %v1889
        %v1891 = vand.u32 %v1890, 4294901760
        %1892 = vmatpush.xpose.msra.mxu0 %v1891
        %v1893 = vand.u32 %v613, 4294901760
        %v1894 = vsub.f32 %v613, %v1893
        %v1895 = vand.u32 %v1894, 4294901760
        %1896 = vmatpush.xpose.msra.mxu0 %v1895
        %v1897 = vand.u32 %v611, 4294901760
        %v1898 = vsub.f32 %v611, %v1897
        %v1899 = vand.u32 %v1898, 4294901760
        %1900 = vmatpush.xpose.msra.mxu0 %v1899
        %v1901 = vand.u32 %v609, 4294901760
        %v1902 = vsub.f32 %v609, %v1901
        %v1903 = vand.u32 %v1902, 4294901760
        %1904 = vmatpush.xpose.msra.mxu0 %v1903
        %v1905 = vand.u32 %v607, 4294901760
        %v1906 = vsub.f32 %v607, %v1905
        %v1907 = vand.u32 %v1906, 4294901760
        %1908 = vmatpush.xpose.msra.mxu0 %v1907
        %v1909 = vand.u32 %v605, 4294901760
        %v1910 = vsub.f32 %v605, %v1909
        %v1911 = vand.u32 %v1910, 4294901760
        %1912 = vmatpush.xpose.msra.mxu0 %v1911
        %v1913 = vand.u32 %v603, 4294901760
        %v1914 = vsub.f32 %v603, %v1913
        %v1915 = vand.u32 %v1914, 4294901760
        %1916 = vmatpush.xpose.msra.mxu0 %v1915
        %v1917 = vand.u32 %v601, 4294901760
        %v1918 = vsub.f32 %v601, %v1917
        %v1919 = vand.u32 %v1918, 4294901760
        %1920 = vmatpush.xpose.msra.mxu0 %v1919
        %v1921 = vand.u32 %v599, 4294901760
        %v1922 = vsub.f32 %v599, %v1921
        %v1923 = vand.u32 %v1922, 4294901760
        %1924 = vmatpush.xpose.msra.mxu0 %v1923
        %v1925 = vand.u32 %v597, 4294901760
        %v1926 = vsub.f32 %v597, %v1925
        %v1927 = vand.u32 %v1926, 4294901760
        %1928 = vmatpush.xpose.msra.mxu0 %v1927
        %v1929 = vand.u32 %v595, 4294901760
        %v1930 = vsub.f32 %v595, %v1929
        %v1931 = vand.u32 %v1930, 4294901760
        %1932 = vmatpush.xpose.msra.mxu0 %v1931
        %v1933 = vand.u32 %v593, 4294901760
        %v1934 = vsub.f32 %v593, %v1933
        %v1935 = vand.u32 %v1934, 4294901760
        %1936 = vmatpush.xpose.msra.mxu0 %v1935
        %v1937 = vand.u32 %v591, 4294901760
        %v1938 = vsub.f32 %v591, %v1937
        %v1939 = vand.u32 %v1938, 4294901760
        %1940 = vmatpush.xpose.msra.mxu0 %v1939
        %v1941 = vand.u32 %v589, 4294901760
        %v1942 = vsub.f32 %v589, %v1941
        %v1943 = vand.u32 %v1942, 4294901760
        %1944 = vmatpush.xpose.msra.mxu0 %v1943
        %v1945 = vand.u32 %v587, 4294901760
        %v1946 = vsub.f32 %v587, %v1945
        %v1947 = vand.u32 %v1946, 4294901760
        %1948 = vmatpush.xpose.msra.mxu0 %v1947
        %v1949 = vand.u32 %v585, 4294901760
        %v1950 = vsub.f32 %v585, %v1949
        %v1951 = vand.u32 %v1950, 4294901760
        %1952 = vmatpush.xpose.msra.mxu0 %v1951
        %v1953 = vand.u32 %v1310, 4294901760
        %1954 = vmatmul.f32.gmra.mxu0 %v1953
        %v1955 = vpop.f32.mrf.mxu0
        %v1956 = vadd.f32 %v1887, %v1955
        %1957 = vdwg.mxu0
        %v1958 = vand.u32 %v615, 4294901760
        %1959 = vmatpush.xpose.msra.mxu0 %v1958
        %v1960 = vand.u32 %v613, 4294901760
        %1961 = vmatpush.xpose.msra.mxu0 %v1960
        %v1962 = vand.u32 %v611, 4294901760
        %1963 = vmatpush.xpose.msra.mxu0 %v1962
        %v1964 = vand.u32 %v609, 4294901760
        %1965 = vmatpush.xpose.msra.mxu0 %v1964
        %v1966 = vand.u32 %v607, 4294901760
        %1967 = vmatpush.xpose.msra.mxu0 %v1966
        %v1968 = vand.u32 %v605, 4294901760
        %1969 = vmatpush.xpose.msra.mxu0 %v1968
        %v1970 = vand.u32 %v603, 4294901760
        %1971 = vmatpush.xpose.msra.mxu0 %v1970
        %v1972 = vand.u32 %v601, 4294901760
        %1973 = vmatpush.xpose.msra.mxu0 %v1972
        %v1974 = vand.u32 %v599, 4294901760
        %1975 = vmatpush.xpose.msra.mxu0 %v1974
        %v1976 = vand.u32 %v597, 4294901760
        %1977 = vmatpush.xpose.msra.mxu0 %v1976
        %v1978 = vand.u32 %v595, 4294901760
        %1979 = vmatpush.xpose.msra.mxu0 %v1978
        %v1980 = vand.u32 %v593, 4294901760
        %1981 = vmatpush.xpose.msra.mxu0 %v1980
        %v1982 = vand.u32 %v591, 4294901760
        %1983 = vmatpush.xpose.msra.mxu0 %v1982
        %v1984 = vand.u32 %v589, 4294901760
        %1985 = vmatpush.xpose.msra.mxu0 %v1984
        %v1986 = vand.u32 %v587, 4294901760
        %1987 = vmatpush.xpose.msra.mxu0 %v1986
        %v1988 = vand.u32 %v585, 4294901760
        %1989 = vmatpush.xpose.msra.mxu0 %v1988
        %v1990 = vand.u32 %v1310, 4294901760
        %1991 = vmatmul.f32.gmra.mxu0 %v1990
        %v1992 = vpop.f32.mrf.mxu0
        %v1993 = vadd.f32 %v1956, %v1992
        %1994 = vdwg.mxu0
        %1995 = vst [vmem:[%s279] sm:$0x3] %v1993
        %s1996 = sand.u32 %s109, 1
        %s1997 = scalar_lea.sflag [#allocation4], %s1996
        %s1998 = sand.u32 %s109, 1
        %s1999 = smul.addr %s1998, 4
        %s2000 = scalar_lea.vmem [#allocation8], %s1999
        %s2001 = sand.u32 %s135, 1
        %s2002 = scalar_lea.sflag [#allocation10], %s2001
        %s2003 = sand.u32 %s135, 1
        %s2004 = smul.addr %s2003, 2
        %s2005 = scalar_lea.vmem [#allocation9], %s2004
        // Predicated region
        $region45: #{tpu_custom_call.1} parent=31 // pred_check
          %p2006 = pneg %p119
        $region46: #{tpu_custom_call.1} parent=31 // pred_check_branch
          %2008 = sbr.rel (%p2006) target = $region48
        $region47: #{tpu_custom_call.1} parent=31 // pred_region
          %2010 = vsyncadd %s1997, 0
          %s2011 = smul.addr %s28, 4
          %s2012 = scalar_lea.hbm %s3, %s2011
          %s2014 = sshll.u32 %s2000, 4
          %s2015 = int_to_ptr.vmem [resolvable:$true] %s2014
          %s2016 = sshll.u32 %s2012, 4
          %s2017 = int_to_ptr.hbm [resolvable:$true] %s2016
          %2019 = dma.vmem_to_hbm [thread:$0]  %s2015, 64, %s2017, %s1997
        $region48: #{tpu_custom_call.1} parent=31 // pred_fallthru
          _
        // Predicated region
        $region49: #{tpu_custom_call.1} parent=31 // pred_check
          %p2020 = pneg %p145
        $region50: #{tpu_custom_call.1} parent=31 // pred_check_branch
          %2022 = sbr.rel (%p2020) target = $region52
        $region51: #{tpu_custom_call.1} parent=31 // pred_region
          %2024 = vsyncadd %s2002, 0
          %s2025 = smul.addr %s28, 2
          %s2026 = scalar_lea.hbm %s4, %s2025
          %s2028 = sshll.u32 %s2005, 4
          %s2029 = int_to_ptr.vmem [resolvable:$true] %s2028
          %s2030 = sshll.u32 %s2026, 4
          %s2031 = int_to_ptr.hbm [resolvable:$true] %s2030
          %2033 = dma.vmem_to_hbm [thread:$0]  %s2029, 32, %s2031, %s2002
        $region52: #{tpu_custom_call.1} parent=31 // pred_fallthru
          _
      $region32: #{tpu_custom_call.1} parent=5 // pred_fallthru
        _
      %p2034 = scmp.le.s32.totalorder 2, %s23
      // Predicated region
      $region53: #{tpu_custom_call.1} parent=5 // pred_check
        %p2035 = pneg %p2034
      $region54: #{tpu_custom_call.1} parent=5 // pred_check_branch
        %2037 = sbr.rel (%p2035) target = $region56
      $region55: #{tpu_custom_call.1} parent=5 // pred_region
        %s2038 = ssub.s32 %s23, 2
        // Predicated region
        $region57: #{tpu_custom_call.1} parent=55 // pred_check
          %p2039 = pneg %p125
        $region58: #{tpu_custom_call.1} parent=55 // pred_check_branch
          %2041 = sbr.rel (%p2039) target = $region60
        $region59: #{tpu_custom_call.1} parent=55 // pred_region
          %s2042 = sand.u32 %s110, 1
          %s2043 = scalar_lea.sflag [#allocation4], %s2042
          %s2044 = sand.u32 %s110, 1
          %s2045 = smul.addr %s2044, 4
          %s2046 = scalar_lea.vmem [#allocation8], %s2045
          %2048 = dma.done %s2043, 64
        $region60: #{tpu_custom_call.1} parent=55 // pred_fallthru
          _
        // Predicated region
        $region61: #{tpu_custom_call.1} parent=55 // pred_check
          %p2049 = pneg %p151
        $region62: #{tpu_custom_call.1} parent=55 // pred_check_branch
          %2051 = sbr.rel (%p2049) target = $region64
        $region63: #{tpu_custom_call.1} parent=55 // pred_region
          %s2052 = sand.u32 %s136, 1
          %s2053 = scalar_lea.sflag [#allocation10], %s2052
          %s2054 = sand.u32 %s136, 1
          %s2055 = smul.addr %s2054, 2
          %s2056 = scalar_lea.vmem [#allocation9], %s2055
          %2058 = dma.done %s2053, 32
        $region64: #{tpu_custom_call.1} parent=55 // pred_fallthru
          _
      $region56: #{tpu_custom_call.1} parent=5 // pred_fallthru
        _
    $region6: #{tpu_custom_call.1} parent=1 // loop_footer
      %s27 = sadd.s32 1, %s23
    $region7: #{tpu_custom_call.1} parent=1 // loop_footer_branch
      %22 = sbr.rel target = $region3
    $region8: #{tpu_custom_call.1} parent=1 // loop_exit
      _
    %2059 = vsyncpa [#allocation3], 1
    %s2060 = scalar_lea.sflag [#allocation3], 1
    %2061 = vsyncpa %s2060, 1
    %2062 = vsyncpa [#allocation6], 1
    %s2063 = scalar_lea.sflag [#allocation6], 1
    %2064 = vsyncpa %s2063, 1
    %2065 = vsyncpa [#allocation4], 1
    %s2066 = scalar_lea.sflag [#allocation4], 1
    %2067 = vsyncpa %s2066, 1
    %2068 = vsyncpa [#allocation10], 1
    %s2069 = scalar_lea.sflag [#allocation10], 1
    %2070 = vsyncpa %s2069, 1

</llo_original>
